<compile_context>
chip_gen: v7x
topology: tpu7x:2x2x1
jax: 0.10.0
libtpu: 0.0.40
codegen_flags: <defaults>
</compile_context>

<pallas_src>
import math
from functools import partial

import jax
import jax.numpy as jnp
from jax.experimental import pallas as pl
from jax.experimental.pallas import tpu as pltpu

LEAKY_ALPHA = 0.15   # LeakyReLU slope from SpGraphAttentionLayer(., ., 0.05, 0.15)
BETA = 0.5           # PROST_NN_sparse.beta


# ---------------------------------------------------------------------------
# Pass 1: h = x @ W  and  s = h @ [a1 | a2]   (one row tile per grid step)
# ---------------------------------------------------------------------------
def h_s_kernel(x_ref, w_ref, a_ref, h_ref, s_ref):
    h = jnp.dot(x_ref[...], w_ref[...], preferred_element_type=jnp.float32)  # (ti, E) f32
    s_ref[...] = jnp.dot(h, a_ref[...], preferred_element_type=jnp.float32)  # (ti, 2) f32
    h_ref[...] = h.astype(h_ref.dtype)                                        # bf16


# ---------------------------------------------------------------------------
# Pass 2: flash-style sparse graph attention + student-t soft assignment
# ---------------------------------------------------------------------------
def attn_q_kernel(nz_ref, fj_ref,                                  # scalar prefetch (SMEM)
                  adj_ref, h_ref, s1_ref, s2_ref, mu_ref, musq_ref,  # inputs
                  z_ref, q_ref,                                      # outputs
                  acc_ref,                                           # VMEM scratch (ti, E+1)
                  *, elem_dtype):
    i = pl.program_id(0)
    j = pl.program_id(1)
    nj = pl.num_programs(1)
    E = mu_ref.shape[1]

    @pl.when(j == 0)
    def _init():
        acc_ref[...] = jnp.zeros_like(acc_ref)

    # Block-sparse skip: fully masked (i, j) tiles do no exp / MXU work at all
    # (and their adj / h_j / s2 DMAs were already elided via the fetch_j index maps).
    @pl.when(nz_ref[i * nj + j] > 0)
    def _accumulate():
        logits = s1_ref[...].astype(elem_dtype) + s2_ref[...].astype(elem_dtype)  # (ti,tj)
        alpha = jnp.asarray(LEAKY_ALPHA, elem_dtype)
        lrelu = jnp.where(logits > 0, logits, alpha * logits)
        mask = adj_ref[...] != 0                       # int8 compare, no f32 unpack
        neg_inf = jnp.asarray(-jnp.inf, elem_dtype)
        # Select *before* exp: exp(-inf) == 0 off-edge, so an overflowing exp on a
        # non-edge can never produce inf * 0 -> NaN.
        e = jnp.exp(jnp.where(mask, -lrelu, neg_inf))  # (ti, tj) elem_dtype
        # h_ref is [h | 1] (tj, E+1): the last column accumulates the rowsum for free
        # in the spare MXU output width.
        acc_ref[...] += jnp.dot(e.astype(jnp.bfloat16), h_ref[...],
                                preferred_element_type=jnp.float32)

    @pl.when(j == nj - 1)
    def _finalize():
        # TODO(synk): a node with no edges at all (no self-loop) yields z == 0 here,
        # whereas the torch layer would emit NaN; PROST always feeds adj with
        # self-loops so this case does not arise in practice.
        acc = acc_ref[...]
        num = acc[:, :E]                               # (ti, E)  sum_j e_ij h_j
        rowsum = acc[:, E:E + 1]                       # (ti, 1)  sum_j e_ij
        inv = pl.reciprocal(rowsum + 1e-30)            # exact divide; epilogue only
        hp = num * inv
        z = jnp.where(hp > 0, hp, jnp.expm1(jnp.minimum(hp, 0.0)))   # ELU(alpha=1)
        z_ref[...] = z.astype(z_ref.dtype)

        # Student-t soft assignment q (beta = 0.5). The reference's "/ 2.0" cancels
        # in the row normalization and is dropped.
        mu = mu_ref[...]                               # (K, E)
        z_sq = jnp.sum(z * z, axis=1, keepdims=True)   # (ti, 1)
        cross = jax.lax.dot_general(z, mu, (((1,), (1,)), ((), ())),
                                    preferred_element_type=jnp.float32)   # (ti, K)
        dist = z_sq + musq_ref[...] - 2.0 * cross      # ||z_i - mu_k||^2
        q = pl.reciprocal(1.0 + dist * (1.0 / BETA) + 1e-8)   # 1/(1 + d/beta + 1e-8)
        q = q * jnp.sqrt(q)                            # q ** (beta + 1) = q ** 1.5
        q_ref[...] = q * pl.reciprocal(jnp.sum(q, axis=1, keepdims=True))


# ---------------------------------------------------------------------------
# Wrapper
# ---------------------------------------------------------------------------
def _default_elem_dtype():
    """bf16 elementwise/exp path on chips with bf16 VPU/EUP (v6e, v7x), f32 otherwise."""
    try:
        kind = jax.devices()[0].device_kind.lower()
    except Exception:
        return jnp.float32
    if ("v6" in kind) or ("v7" in kind):
        return jnp.bfloat16
    return jnp.float32


def prost_nn_sparse_forward(x, adj, W, a1, a2, mu, *, tile_i=256, tile_j=512,
                            elem_dtype=None):
    """z, q = PROST_NN_sparse.forward(x, adj) with params (W, a=[a1;a2], mu)."""
    N, F = x.shape
    E = W.shape[1]
    K = mu.shape[0]
    if elem_dtype is None:
        elem_dtype = _default_elem_dtype()

    # Pad N to a common multiple of both tiles (adj is square, h/s/z/q share rows).
    lcm = tile_i * tile_j // math.gcd(tile_i, tile_j)
    n_pad = int(pl.cdiv(N, lcm)) * lcm
    n_i = n_pad // tile_i
    n_j = n_pad // tile_j

    # bf16 MXU operands; f32 accumulation stays inside the kernels.
    x_p = jnp.zeros((n_pad, F), jnp.bfloat16).at[:N].set(x.astype(jnp.bfloat16))
    w_b = W.astype(jnp.bfloat16)
    a = jnp.concatenate([a1, a2], axis=1).astype(jnp.float32)          # (E, 2)

    # int8 edge mask (only adj != 0 is used by the layer).
    adj_i8 = jnp.zeros((n_pad, n_pad), jnp.int8).at[:N, :N].set(
        (adj != 0).astype(jnp.int8))

    # Per-(i, j)-tile nonzero flags for block-sparse skipping (scalar prefetch, SMEM).
    # int32-accumulating reduce over the int8 tiles -- no 4*N^2-byte int32 temp.
    counts = jnp.sum(adj_i8.reshape(n_i, tile_i, n_j, tile_j),
                     axis=(1, 3), dtype=jnp.int32)                     # (n_i, n_j)
    nz = (counts.reshape(-1) > 0).astype(jnp.int32)                    # (n_i*n_j,)
    # "Last nonzero j-tile so far" chain (row-major grid order): empty tiles make the
    # adj / h_j / s2 index_maps return the previously fetched block index, so the
    # pipeline skips the DMA for fully-masked tiles.
    T = n_i * n_j
    steps = jnp.arange(T, dtype=jnp.int32)
    last_nz = jax.lax.cummax(jnp.where(nz > 0, steps, 0))
    fetch_j = (steps % n_j).astype(jnp.int32)[last_nz]                 # (n_i*n_j,)

    # ---- pass 1: h, s ------------------------------------------------------
    p1_tile = lcm if lcm <= 1024 else tile_i                            # big row tile
    h, s = pl.pallas_call(
        h_s_kernel,
        out_shape=(jax.ShapeDtypeStruct((n_pad, E), jnp.bfloat16),
                   jax.ShapeDtypeStruct((n_pad, 2), jnp.float32)),
        grid=(n_pad // p1_tile,),
        in_specs=[pl.BlockSpec((p1_tile, F), lambda i: (i, 0)),
                  pl.BlockSpec((F, E), lambda i: (0, 0)),
                  pl.BlockSpec((E, 2), lambda i: (0, 0))],
        out_specs=(pl.BlockSpec((p1_tile, E), lambda i: (i, 0)),
                   pl.BlockSpec((p1_tile, 2), lambda i: (i, 0))),
        compiler_params=pltpu.CompilerParams(dimension_semantics=("parallel",)),
    )(x_p, w_b, a)

    # Append a ones column so pass 2 gets the rowsum for free from the MXU.
    h_aug = jnp.concatenate([h, jnp.ones((n_pad, 1), jnp.bfloat16)], axis=1)  # (n_pad, E+1)

    s1 = s[:, 0:1]                                  # (n_pad, 1)  a1·h_i
    s2_row = s[:, 1:2].reshape(1, n_pad)            # (1, n_pad)  a2·h_j (no in-kernel transpose)
    mu_f = mu.astype(jnp.float32)
    mu_sq = jnp.sum(mu_f * mu_f, axis=1).reshape(1, K)

    # ---- pass 2: attention aggregation + q ----------------------------------
    z, q = pl.pallas_call(
        partial(attn_q_kernel, elem_dtype=elem_dtype),
        out_shape=(jax.ShapeDtypeStruct((n_pad, E), jnp.float32),
                   jax.ShapeDtypeStruct((n_pad, K), jnp.float32)),
        grid_spec=pltpu.PrefetchScalarGridSpec(
            num_scalar_prefetch=2,
            grid=(n_i, n_j),
            in_specs=[
                # adj tile (int8): reuse the previously fetched j-tile when masked out.
                pl.BlockSpec((tile_i, tile_j),
                             lambda i, j, nz_r, fj_r: (i, fj_r[i * n_j + j])),
                # [h | 1] tile (bf16)
                pl.BlockSpec((tile_j, E + 1),
                             lambda i, j, nz_r, fj_r: (fj_r[i * n_j + j], 0)),
                # s1_i
                pl.BlockSpec((tile_i, 1), lambda i, j, nz_r, fj_r: (i, 0)),
                # s2_j (row)
                pl.BlockSpec((1, tile_j),
                             lambda i, j, nz_r, fj_r: (0, fj_r[i * n_j + j])),
                # mu, mu_sq (resident)
                pl.BlockSpec((K, E), lambda i, j, nz_r, fj_r: (0, 0)),
                pl.BlockSpec((1, K), lambda i, j, nz_r, fj_r: (0, 0)),
            ],
            out_specs=(pl.BlockSpec((tile_i, E), lambda i, j, nz_r, fj_r: (i, 0)),
                       pl.BlockSpec((tile_i, K), lambda i, j, nz_r, fj_r: (i, 0))),
            scratch_shapes=[pltpu.VMEM((tile_i, E + 1), jnp.float32)],
        ),
        compiler_params=pltpu.CompilerParams(
            dimension_semantics=("parallel", "arbitrary")),
    )(nz, fetch_j, adj_i8, h_aug, s1, s2_row, mu_f, mu_sq)

    return z[:N], q[:N]


# ---------------------------------------------------------------------------
# Pure-JAX reference (torch semantics, same bf16 MXU precision policy) for checks.
# ---------------------------------------------------------------------------
def ref_forward(x, adj, W, a1, a2, mu):
    h = jnp.dot(x.astype(jnp.bfloat16), W.astype(jnp.bfloat16),
                preferred_element_type=jnp.float32)
    s1 = h @ a1
    s2 = h @ a2
    logits = s1 + s2.T
    lrelu = jnp.where(logits > 0, logits, LEAKY_ALPHA * logits)
    e = jnp.exp(jnp.where(adj != 0, -lrelu, -jnp.inf))
    rowsum = jnp.sum(e, axis=1, keepdims=True)
    hp = jnp.dot(e.astype(jnp.bfloat16), h.astype(jnp.bfloat16),
                 preferred_element_type=jnp.float32) / rowsum
    z = jnp.where(hp > 0, hp, jnp.expm1(jnp.minimum(hp, 0.0)))
    d = jnp.sum((z[:, None, :] - mu[None, :, :]) ** 2, axis=2)
    q = 1.0 / (1.0 + d / BETA + 1e-8)
    q = q ** (BETA + 1.0) / 2.0
    q = q / jnp.sum(q, axis=1, keepdims=True)
    return z, q


if __name__ == "__main__":
    # Small deterministic shapes consistent with the module:
    # N nodes, nfeat input features, embedding_size, n_clusters.
    N, nfeat, emb, K = 16, 32, 16, 7

    key = jax.random.PRNGKey(0)
    kx, kadj, kw, ka, kmu = jax.random.split(key, 5)

    x = jax.random.normal(kx, (N, nfeat), dtype=jnp.float32)

    # Deterministic sparse adjacency (edge-presence mask) with self-loops so rowsum > 0.
    adj = (jax.random.uniform(kadj, (N, N)) < 0.2).astype(jnp.float32)
    adj = jnp.maximum(adj, jnp.eye(N, dtype=jnp.float32))

    # Xavier-normal-ish deterministic parameter init (gain ~1.414 as in pyGAT).
    W = jax.random.normal(kw, (nfeat, emb), dtype=jnp.float32) * (
        1.414 * (2.0 / (nfeat + emb)) ** 0.5)
    a = jax.random.normal(ka, (2 * emb, 1), dtype=jnp.float32) * (
        1.414 * (2.0 / (1 + 2 * emb)) ** 0.5)
    a1, a2 = a[:emb], a[emb:]                       # halves of the attention vector
    mu = jax.random.normal(kmu, (K, emb), dtype=jnp.float32)   # cluster centers (synthetic)

    z, q = prost_nn_sparse_forward(x, adj, W, a1, a2, mu)
    jax.block_until_ready((z, q))

    z_ref, q_ref = ref_forward(x, adj, W, a1, a2, mu)

    assert z.shape == (N, emb) and q.shape == (N, K)
    assert bool(jnp.all(jnp.isfinite(z))) and bool(jnp.all(jnp.isfinite(q)))
    assert bool(jnp.allclose(jnp.sum(q, axis=1), 1.0, atol=1e-5))
    z_scale = max(1.0, float(jnp.max(jnp.abs(z_ref))))
    assert float(jnp.max(jnp.abs(z - z_ref))) <= 3e-2 * z_scale, "z mismatch vs reference"
    assert float(jnp.max(jnp.abs(q - q_ref))) <= 3e-2, "q mismatch vs reference"
    print("KERNEL_OK")
</pallas_src>

<mosaic_0001>
module attributes {stable_mosaic.version = 11 : i64} {
  func.func @h_s_kernel(%arg0: i32, %arg1: memref<512x32xbf16, #tpu.memory_space<vmem>>, %arg2: memref<32x16xbf16, #tpu.memory_space<vmem>>, %arg3: memref<16x2xf32, #tpu.memory_space<vmem>>, %arg4: memref<512x16xbf16, #tpu.memory_space<vmem>>, %arg5: memref<512x2xf32, #tpu.memory_space<vmem>>) attributes {dimension_semantics = [#tpu.dimension_semantics<parallel>], iteration_bounds = array<i64: 1>, scalar_prefetch = 0 : i64, scratch_operands = 0 : i64, tpu.core_type = #tpu.core_type<tc>, window_params = [{transform_indices = @transform_0, window_bounds = array<i64: 512, 32>}, {pipeline_mode = #tpu.pipeline_mode<synchronous>, transform_indices = @transform_1, window_bounds = array<i64: 32, 16>}, {pipeline_mode = #tpu.pipeline_mode<synchronous>, transform_indices = @transform_2, window_bounds = array<i64: 16, 2>}, {transform_indices = @transform_3, window_bounds = array<i64: 512, 16>}, {transform_indices = @transform_4, window_bounds = array<i64: 512, 2>}]} {
    %c0 = arith.constant 0 : index
    %c0_0 = arith.constant 0 : index
    %0 = vector.load %arg1[%c0, %c0_0] : memref<512x32xbf16, #tpu.memory_space<vmem>>, vector<512x32xbf16>
    %c0_1 = arith.constant 0 : index
    %c0_2 = arith.constant 0 : index
    %1 = vector.load %arg2[%c0_1, %c0_2] : memref<32x16xbf16, #tpu.memory_space<vmem>>, vector<32x16xbf16>
    %cst = arith.constant dense<0.000000e+00> : vector<512x16xf32>
    %2 = tpu.matmul %0, %1, %cst {dimension_numbers = #tpu.dot_dimension_numbers<[1], [0], [0], [1], [0, 0, 1, 1], [], []>} : vector<512x32xbf16>, vector<32x16xbf16>, vector<512x16xf32> -> vector<512x16xf32>
    %c0_3 = arith.constant 0 : index
    %c0_4 = arith.constant 0 : index
    %3 = vector.load %arg3[%c0_3, %c0_4] : memref<16x2xf32, #tpu.memory_space<vmem>>, vector<16x2xf32>
    %cst_5 = arith.constant dense<0.000000e+00> : vector<512x2xf32>
    %4 = tpu.matmul %2, %3, %cst_5 {dimension_numbers = #tpu.dot_dimension_numbers<[1], [0], [0], [1], [0, 0, 1, 1], [], []>} : vector<512x16xf32>, vector<16x2xf32>, vector<512x2xf32> -> vector<512x2xf32>
    %c0_6 = arith.constant 0 : index
    %c0_7 = arith.constant 0 : index
    %5 = vector.load %arg5[%c0_6, %c0_7] : memref<512x2xf32, #tpu.memory_space<vmem>>, vector<512x2xf32>
    tpu.vector_store %arg5[%c0_6, %c0_7], %4 {strides = array<i32>} : memref<512x2xf32, #tpu.memory_space<vmem>>, vector<512x2xf32>,
    %6 = arith.truncf %2 : vector<512x16xf32> to vector<512x16xbf16>
    %c0_8 = arith.constant 0 : index
    %c0_9 = arith.constant 0 : index
    %7 = vector.load %arg4[%c0_8, %c0_9] : memref<512x16xbf16, #tpu.memory_space<vmem>>, vector<512x16xbf16>
    tpu.vector_store %arg4[%c0_8, %c0_9], %6 {strides = array<i32>} : memref<512x16xbf16, #tpu.memory_space<vmem>>, vector<512x16xbf16>,
    return
  }
  func.func @transform_0(%arg0: i32) -> (i32, i32) {
    %c0_i32 = arith.constant 0 : i32
    %c0_i32_0 = arith.constant 0 : i32
    return %arg0, %c0_i32 : i32, i32
  }
  func.func @transform_1(%arg0: i32) -> (i32, i32) {
    %c0_i32 = arith.constant 0 : i32
    %c0_i32_0 = arith.constant 0 : i32
    %c0_i32_1 = arith.constant 0 : i32
    return %c0_i32, %c0_i32_0 : i32, i32
  }
  func.func @transform_2(%arg0: i32) -> (i32, i32) {
    %c0_i32 = arith.constant 0 : i32
    %c0_i32_0 = arith.constant 0 : i32
    %c0_i32_1 = arith.constant 0 : i32
    return %c0_i32, %c0_i32_0 : i32, i32
  }
  func.func @transform_3(%arg0: i32) -> (i32, i32) {
    %c0_i32 = arith.constant 0 : i32
    %c0_i32_0 = arith.constant 0 : i32
    return %arg0, %c0_i32 : i32, i32
  }
  func.func @transform_4(%arg0: i32) -> (i32, i32) {
    %c0_i32 = arith.constant 0 : i32
    %c0_i32_0 = arith.constant 0 : i32
    return %arg0, %c0_i32 : i32, i32
  }
}

</mosaic_0001>

<llo_original>
// kernel: tpu_custom_call.1
$region0: #{tpu_custom_call.1}
  #allocation0 [shape = 'u32[]', space=smem, size = 0x4, offset = 0x4, fixed_abs, tag = 'smem constant byte address 0x4 - core index']
  #allocation1 [shape = 'u32[144,128]{1,0:T(1,128)}', space=vmem, size = 0x12000, scoped, tag = 'internal scratch']
  %s0 = inlined_call_operand.vmem [shape: bf16[512,32], index: 0, kind: input, shape index: {}]
  %s1 = inlined_call_operand.vmem [shape: bf16[32,16], index: 1, kind: input, shape index: {}]
  %s2 = inlined_call_operand.vmem [shape: f32[16,2], index: 2, kind: input, shape index: {}]
  %s3 = inlined_call_operand.vmem [shape: bf16[512,16], index: 3, kind: output, shape index: {0}]
  %s4 = inlined_call_operand.vmem [shape: f32[512,2], index: 4, kind: output, shape index: {1}]
  %5 = xla_tuple %s3, %s4
  %s6 = sld [smem:[#allocation0]]
  $region30: #{tpu_custom_call.1} parent=0
    _
  %s8 = ssub.s32 1, %s6
  %s9 = scalar_select 0, %s8, %s6
  // Predicated region
  $region2: #{tpu_custom_call.1} parent=0 // pred_check
    _
  $region3: #{tpu_custom_call.1} parent=0 // pred_check_branch
    %11 = sbr.rel (0) target = $region5
  $region4: #{tpu_custom_call.1} parent=0 // pred_region
    _
  $region5: #{tpu_custom_call.1} parent=0 // pred_fallthru
    _
  // Predicated region
  $region6: #{tpu_custom_call.1} parent=0 // pred_check
    _
  $region7: #{tpu_custom_call.1} parent=0 // pred_check_branch
    %13 = sbr.rel (0) target = $region9
  $region8: #{tpu_custom_call.1} parent=0 // pred_region
    _
  $region9: #{tpu_custom_call.1} parent=0 // pred_fallthru
    _
  // Predicated region
  $region10: #{tpu_custom_call.1} parent=0 // pred_check
    _
  $region11: #{tpu_custom_call.1} parent=0 // pred_check_branch
    %15 = sbr.rel (0) target = $region13
  $region12: #{tpu_custom_call.1} parent=0 // pred_region
    _
  $region13: #{tpu_custom_call.1} parent=0 // pred_fallthru
    _
  %v17 = vld [vmem:[%s0] sm:$0xf]
  %v18 = vld [vmem:[%s0 + $0x4] sm:$0xf]
  %v19 = vld [vmem:[%s0 + $0x8] sm:$0xf]
  %v20 = vld [vmem:[%s0 + $0xc] sm:$0xf]
  %v21 = vld [vmem:[%s0 + $0x10] sm:$0xf]
  %v22 = vld [vmem:[%s0 + $0x14] sm:$0xf]
  %v23 = vld [vmem:[%s0 + $0x18] sm:$0xf]
  %v24 = vld [vmem:[%s0 + $0x1c] sm:$0xf]
  %v25 = vld [vmem:[%s0 + $0x20] sm:$0xf]
  %v26 = vld [vmem:[%s0 + $0x24] sm:$0xf]
  %v27 = vld [vmem:[%s0 + $0x28] sm:$0xf]
  %v28 = vld [vmem:[%s0 + $0x2c] sm:$0xf]
  %v29 = vld [vmem:[%s0 + $0x30] sm:$0xf]
  %v30 = vld [vmem:[%s0 + $0x34] sm:$0xf]
  %v31 = vld [vmem:[%s0 + $0x38] sm:$0xf]
  %v32 = vld [vmem:[%s0 + $0x3c] sm:$0xf]
  %v33 = vld [vmem:[%s0 + $0x40] sm:$0xf]
  %v34 = vld [vmem:[%s0 + $0x44] sm:$0xf]
  %v35 = vld [vmem:[%s0 + $0x48] sm:$0xf]
  %v36 = vld [vmem:[%s0 + $0x4c] sm:$0xf]
  %v37 = vld [vmem:[%s0 + $0x50] sm:$0xf]
  %v38 = vld [vmem:[%s0 + $0x54] sm:$0xf]
  %v39 = vld [vmem:[%s0 + $0x58] sm:$0xf]
  %v40 = vld [vmem:[%s0 + $0x5c] sm:$0xf]
  %v41 = vld [vmem:[%s0 + $0x60] sm:$0xf]
  %v42 = vld [vmem:[%s0 + $0x64] sm:$0xf]
  %v43 = vld [vmem:[%s0 + $0x68] sm:$0xf]
  %v44 = vld [vmem:[%s0 + $0x6c] sm:$0xf]
  %v45 = vld [vmem:[%s0 + $0x70] sm:$0xf]
  %v46 = vld [vmem:[%s0 + $0x74] sm:$0xf]
  %v47 = vld [vmem:[%s0 + $0x78] sm:$0xf]
  %v48 = vld [vmem:[%s0 + $0x7c] sm:$0xf]
  %v49 = vld [vmem:[%s0 + $0x80] sm:$0xf]
  %v50 = vld [vmem:[%s0 + $0x84] sm:$0xf]
  %v51 = vld [vmem:[%s0 + $0x88] sm:$0xf]
  %v52 = vld [vmem:[%s0 + $0x8c] sm:$0xf]
  %v53 = vld [vmem:[%s0 + $0x90] sm:$0xf]
  %v54 = vld [vmem:[%s0 + $0x94] sm:$0xf]
  %v55 = vld [vmem:[%s0 + $0x98] sm:$0xf]
  %v56 = vld [vmem:[%s0 + $0x9c] sm:$0xf]
  %v57 = vld [vmem:[%s0 + $0xa0] sm:$0xf]
  %v58 = vld [vmem:[%s0 + $0xa4] sm:$0xf]
  %v59 = vld [vmem:[%s0 + $0xa8] sm:$0xf]
  %v60 = vld [vmem:[%s0 + $0xac] sm:$0xf]
  %v61 = vld [vmem:[%s0 + $0xb0] sm:$0xf]
  %v62 = vld [vmem:[%s0 + $0xb4] sm:$0xf]
  %v63 = vld [vmem:[%s0 + $0xb8] sm:$0xf]
  %v64 = vld [vmem:[%s0 + $0xbc] sm:$0xf]
  %v65 = vld [vmem:[%s0 + $0xc0] sm:$0xf]
  %v66 = vld [vmem:[%s0 + $0xc4] sm:$0xf]
  %v67 = vld [vmem:[%s0 + $0xc8] sm:$0xf]
  %v68 = vld [vmem:[%s0 + $0xcc] sm:$0xf]
  %v69 = vld [vmem:[%s0 + $0xd0] sm:$0xf]
  %v70 = vld [vmem:[%s0 + $0xd4] sm:$0xf]
  %v71 = vld [vmem:[%s0 + $0xd8] sm:$0xf]
  %v72 = vld [vmem:[%s0 + $0xdc] sm:$0xf]
  %v73 = vld [vmem:[%s0 + $0xe0] sm:$0xf]
  %v74 = vld [vmem:[%s0 + $0xe4] sm:$0xf]
  %v75 = vld [vmem:[%s0 + $0xe8] sm:$0xf]
  %v76 = vld [vmem:[%s0 + $0xec] sm:$0xf]
  %v77 = vld [vmem:[%s0 + $0xf0] sm:$0xf]
  %v78 = vld [vmem:[%s0 + $0xf4] sm:$0xf]
  %v79 = vld [vmem:[%s0 + $0xf8] sm:$0xf]
  %v80 = vld [vmem:[%s0 + $0xfc] sm:$0xf]
  %v81 = vld [vmem:[%s1] sm:$0xf]
  %v82 = vld [vmem:[%s1 + $0x4] sm:$0xf]
  %v83 = vld [vmem:[%s1 + $0x8] sm:$0xf]
  %v84 = vld [vmem:[%s1 + $0xc] sm:$0xf]
  %v149 = vunpack.c.l.b16 %v17
  %v150 = vunpack.c.l.b16 %v18
  %v151 = vunpack.c.l.b16 %v19
  %v152 = vunpack.c.l.b16 %v20
  %v153 = vunpack.c.l.b16 %v21
  %v154 = vunpack.c.l.b16 %v22
  %v155 = vunpack.c.l.b16 %v23
  %v156 = vunpack.c.l.b16 %v24
  %v157 = vunpack.c.l.b16 %v25
  %v158 = vunpack.c.l.b16 %v26
  %v159 = vunpack.c.l.b16 %v27
  %v160 = vunpack.c.l.b16 %v28
  %v161 = vunpack.c.l.b16 %v29
  %v162 = vunpack.c.l.b16 %v30
  %v163 = vunpack.c.l.b16 %v31
  %v164 = vunpack.c.l.b16 %v32
  %v165 = vunpack.c.l.b16 %v33
  %v166 = vunpack.c.l.b16 %v34
  %v167 = vunpack.c.l.b16 %v35
  %v168 = vunpack.c.l.b16 %v36
  %v169 = vunpack.c.l.b16 %v37
  %v170 = vunpack.c.l.b16 %v38
  %v171 = vunpack.c.l.b16 %v39
  %v172 = vunpack.c.l.b16 %v40
  %v173 = vunpack.c.l.b16 %v41
  %v174 = vunpack.c.l.b16 %v42
  %v175 = vunpack.c.l.b16 %v43
  %v176 = vunpack.c.l.b16 %v44
  %v177 = vunpack.c.l.b16 %v45
  %v178 = vunpack.c.l.b16 %v46
  %v179 = vunpack.c.l.b16 %v47
  %v180 = vunpack.c.l.b16 %v48
  %v181 = vunpack.c.l.b16 %v49
  %v182 = vunpack.c.l.b16 %v50
  %v183 = vunpack.c.l.b16 %v51
  %v184 = vunpack.c.l.b16 %v52
  %v185 = vunpack.c.l.b16 %v53
  %v186 = vunpack.c.l.b16 %v54
  %v187 = vunpack.c.l.b16 %v55
  %v188 = vunpack.c.l.b16 %v56
  %v189 = vunpack.c.l.b16 %v57
  %v190 = vunpack.c.l.b16 %v58
  %v191 = vunpack.c.l.b16 %v59
  %v192 = vunpack.c.l.b16 %v60
  %v193 = vunpack.c.l.b16 %v61
  %v194 = vunpack.c.l.b16 %v62
  %v195 = vunpack.c.l.b16 %v63
  %v196 = vunpack.c.l.b16 %v64
  %v197 = vunpack.c.l.b16 %v65
  %v198 = vunpack.c.l.b16 %v66
  %v199 = vunpack.c.l.b16 %v67
  %v200 = vunpack.c.l.b16 %v68
  %v201 = vunpack.c.l.b16 %v69
  %v202 = vunpack.c.l.b16 %v70
  %v203 = vunpack.c.l.b16 %v71
  %v204 = vunpack.c.l.b16 %v72
  %v205 = vunpack.c.l.b16 %v73
  %v206 = vunpack.c.l.b16 %v74
  %v207 = vunpack.c.l.b16 %v75
  %v208 = vunpack.c.l.b16 %v76
  %v209 = vunpack.c.l.b16 %v77
  %v210 = vunpack.c.l.b16 %v78
  %v211 = vunpack.c.l.b16 %v79
  %v212 = vunpack.c.l.b16 %v80
  %v213 = vpack.c.b16 %v150, %v149
  %v214 = vpack.c.b16 %v152, %v151
  %v215 = vpack.c.b16 %v154, %v153
  %v216 = vpack.c.b16 %v156, %v155
  %v217 = vpack.c.b16 %v158, %v157
  %v218 = vpack.c.b16 %v160, %v159
  %v219 = vpack.c.b16 %v162, %v161
  %v220 = vpack.c.b16 %v164, %v163
  %v221 = vpack.c.b16 %v166, %v165
  %v222 = vpack.c.b16 %v168, %v167
  %v223 = vpack.c.b16 %v170, %v169
  %v224 = vpack.c.b16 %v172, %v171
  %v225 = vpack.c.b16 %v174, %v173
  %v226 = vpack.c.b16 %v176, %v175
  %v227 = vpack.c.b16 %v178, %v177
  %v228 = vpack.c.b16 %v180, %v179
  %v229 = vpack.c.b16 %v182, %v181
  %v230 = vpack.c.b16 %v184, %v183
  %v231 = vpack.c.b16 %v186, %v185
  %v232 = vpack.c.b16 %v188, %v187
  %v233 = vpack.c.b16 %v190, %v189
  %v234 = vpack.c.b16 %v192, %v191
  %v235 = vpack.c.b16 %v194, %v193
  %v236 = vpack.c.b16 %v196, %v195
  %v237 = vpack.c.b16 %v198, %v197
  %v238 = vpack.c.b16 %v200, %v199
  %v239 = vpack.c.b16 %v202, %v201
  %v240 = vpack.c.b16 %v204, %v203
  %v241 = vpack.c.b16 %v206, %v205
  %v242 = vpack.c.b16 %v208, %v207
  %v243 = vpack.c.b16 %v210, %v209
  %v244 = vpack.c.b16 %v212, %v211
  %v249 = vunpack.c.l.b16 %v81
  %v250 = vunpack.c.l.b16 %v82
  %v251 = vunpack.c.l.b16 %v83
  %v252 = vunpack.c.l.b16 %v84
  %v253 = vpack.c.b16 %v250, %v249
  %v254 = vpack.c.b16 %v252, %v251
  %vm257 = vcmask 261120
  %v259 = vsel %vm257, %v213, 0
  %v262 = vsel %vm257, %v214, 0
  %v265 = vsel %vm257, %v215, 0
  %v268 = vsel %vm257, %v216, 0
  %v271 = vsel %vm257, %v217, 0
  %v274 = vsel %vm257, %v218, 0
  %v277 = vsel %vm257, %v219, 0
  %v280 = vsel %vm257, %v220, 0
  %v283 = vsel %vm257, %v221, 0
  %v286 = vsel %vm257, %v222, 0
  %v289 = vsel %vm257, %v223, 0
  %v292 = vsel %vm257, %v224, 0
  %v295 = vsel %vm257, %v225, 0
  %v298 = vsel %vm257, %v226, 0
  %v301 = vsel %vm257, %v227, 0
  %v304 = vsel %vm257, %v228, 0
  %v307 = vsel %vm257, %v229, 0
  %v310 = vsel %vm257, %v230, 0
  %v313 = vsel %vm257, %v231, 0
  %v316 = vsel %vm257, %v232, 0
  %v319 = vsel %vm257, %v233, 0
  %v322 = vsel %vm257, %v234, 0
  %v325 = vsel %vm257, %v235, 0
  %v328 = vsel %vm257, %v236, 0
  %v331 = vsel %vm257, %v237, 0
  %v334 = vsel %vm257, %v238, 0
  %v337 = vsel %vm257, %v239, 0
  %v340 = vsel %vm257, %v240, 0
  %v343 = vsel %vm257, %v241, 0
  %v346 = vsel %vm257, %v242, 0
  %v349 = vsel %vm257, %v243, 0
  %v352 = vsel %vm257, %v244, 0
  %354 = vmatprep.subr.bf16.mxu0 0
  %355 = vmatpush1.bf16.msra.mxu0 %v253
  %356 = vmatprep.subr.bf16.mxu0 0
  %357 = vmatpush1.bf16.msra.mxu0 %v254
  %358 = vmatprep.subr.bf16.mxu0 0
  %359 = vmatpush1.bf16.msra.mxu0 0
  %360 = vmatprep.subr.bf16.mxu0 0
  %361 = vmatpush1.bf16.msra.mxu0 0
  %362 = vmatprep.subr.bf16.mxu0 0
  %363 = vmatpush1.bf16.msra.mxu0 0
  %364 = vmatprep.subr.bf16.mxu0 0
  %365 = vmatpush1.bf16.msra.mxu0 0
  %366 = vmatprep.subr.bf16.mxu0 0
  %367 = vmatpush1.bf16.msra.mxu0 0
  %368 = vmatprep.subr.bf16.mxu0 0
  %369 = vmatpush1.bf16.msra.mxu0 0
  %370 = vmatprep.subr.bf16.mxu0 0
  %371 = vmatpush1.bf16.msra.mxu0 0
  %372 = vmatprep.subr.bf16.mxu0 0
  %373 = vmatpush1.bf16.msra.mxu0 0
  %374 = vmatprep.subr.bf16.mxu0 0
  %375 = vmatpush1.bf16.msra.mxu0 0
  %376 = vmatprep.subr.bf16.mxu0 0
  %377 = vmatpush1.bf16.msra.mxu0 0
  %378 = vmatprep.subr.bf16.mxu0 0
  %379 = vmatpush1.bf16.msra.mxu0 0
  %380 = vmatprep.subr.bf16.mxu0 0
  %381 = vmatpush1.bf16.msra.mxu0 0
  %382 = vmatprep.subr.bf16.mxu0 0
  %383 = vmatpush1.bf16.msra.mxu0 0
  %384 = vmatprep.subr.bf16.mxu0 0
  %385 = vmatpush1.bf16.msra.mxu0 0
  %386 = vmatprep.mubr.bf16.mxu0 0
  %387 = vmatmul.mubr.bf16.gmra.mrb[0].mxu0 %v259
  %v388 = vpop.f32.mrb[0].mxu0
  %v389 = vadd.f32 0.0, %v388
  %v390 = vpop.f32.mrb[0].mxu0
  %v391 = vpop.f32.mrb[0].mxu0
  %v392 = vadd.f32 0.0, %v391
  %v393 = vpop.f32.mrb[0].mxu0
  %394 = vmatprep.mubr.bf16.mxu0 0
  %395 = vmatmul.mubr.bf16.gmra.mrb[0].mxu0 %v262
  %v396 = vpop.f32.mrb[0].mxu0
  %v397 = vadd.f32 0.0, %v396
  %v398 = vpop.f32.mrb[0].mxu0
  %v399 = vpop.f32.mrb[0].mxu0
  %v400 = vadd.f32 0.0, %v399
  %v401 = vpop.f32.mrb[0].mxu0
  %402 = vmatprep.mubr.bf16.mxu0 0
  %403 = vmatmul.mubr.bf16.gmra.mrb[0].mxu0 %v265
  %v404 = vpop.f32.mrb[0].mxu0
  %v405 = vadd.f32 0.0, %v404
  %v406 = vpop.f32.mrb[0].mxu0
  %v407 = vpop.f32.mrb[0].mxu0
  %v408 = vadd.f32 0.0, %v407
  %v409 = vpop.f32.mrb[0].mxu0
  %410 = vmatprep.mubr.bf16.mxu0 0
  %411 = vmatmul.mubr.bf16.gmra.mrb[0].mxu0 %v268
  %v412 = vpop.f32.mrb[0].mxu0
  %v413 = vadd.f32 0.0, %v412
  %v414 = vpop.f32.mrb[0].mxu0
  %v415 = vpop.f32.mrb[0].mxu0
  %v416 = vadd.f32 0.0, %v415
  %v417 = vpop.f32.mrb[0].mxu0
  %418 = vmatprep.mubr.bf16.mxu0 0
  %419 = vmatmul.mubr.bf16.gmra.mrb[0].mxu0 %v271
  %v420 = vpop.f32.mrb[0].mxu0
  %v421 = vadd.f32 0.0, %v420
  %v422 = vpop.f32.mrb[0].mxu0
  %v423 = vpop.f32.mrb[0].mxu0
  %v424 = vadd.f32 0.0, %v423
  %v425 = vpop.f32.mrb[0].mxu0
  %426 = vmatprep.mubr.bf16.mxu0 0
  %427 = vmatmul.mubr.bf16.gmra.mrb[0].mxu0 %v274
  %v428 = vpop.f32.mrb[0].mxu0
  %v429 = vadd.f32 0.0, %v428
  %v430 = vpop.f32.mrb[0].mxu0
  %v431 = vpop.f32.mrb[0].mxu0
  %v432 = vadd.f32 0.0, %v431
  %v433 = vpop.f32.mrb[0].mxu0
  %434 = vmatprep.mubr.bf16.mxu0 0
  %435 = vmatmul.mubr.bf16.gmra.mrb[0].mxu0 %v277
  %v436 = vpop.f32.mrb[0].mxu0
  %v437 = vadd.f32 0.0, %v436
  %v438 = vpop.f32.mrb[0].mxu0
  %v439 = vpop.f32.mrb[0].mxu0
  %v440 = vadd.f32 0.0, %v439
  %v441 = vpop.f32.mrb[0].mxu0
  %442 = vmatprep.mubr.bf16.mxu0 0
  %443 = vmatmul.mubr.bf16.gmra.mrb[0].mxu0 %v280
  %v444 = vpop.f32.mrb[0].mxu0
  %v445 = vadd.f32 0.0, %v444
  %v446 = vpop.f32.mrb[0].mxu0
  %v447 = vpop.f32.mrb[0].mxu0
  %v448 = vadd.f32 0.0, %v447
  %v449 = vpop.f32.mrb[0].mxu0
  %450 = vmatprep.mubr.bf16.mxu0 0
  %451 = vmatmul.mubr.bf16.gmra.mrb[0].mxu0 %v283
  %v452 = vpop.f32.mrb[0].mxu0
  %v453 = vadd.f32 0.0, %v452
  %v454 = vpop.f32.mrb[0].mxu0
  %v455 = vpop.f32.mrb[0].mxu0
  %v456 = vadd.f32 0.0, %v455
  %v457 = vpop.f32.mrb[0].mxu0
  %458 = vmatprep.mubr.bf16.mxu0 0
  %459 = vmatmul.mubr.bf16.gmra.mrb[0].mxu0 %v286
  %v460 = vpop.f32.mrb[0].mxu0
  %v461 = vadd.f32 0.0, %v460
  %v462 = vpop.f32.mrb[0].mxu0
  %v463 = vpop.f32.mrb[0].mxu0
  %v464 = vadd.f32 0.0, %v463
  %v465 = vpop.f32.mrb[0].mxu0
  %466 = vmatprep.mubr.bf16.mxu0 0
  %467 = vmatmul.mubr.bf16.gmra.mrb[0].mxu0 %v289
  %v468 = vpop.f32.mrb[0].mxu0
  %v469 = vadd.f32 0.0, %v468
  %v470 = vpop.f32.mrb[0].mxu0
  %v471 = vpop.f32.mrb[0].mxu0
  %v472 = vadd.f32 0.0, %v471
  %v473 = vpop.f32.mrb[0].mxu0
  %474 = vmatprep.mubr.bf16.mxu0 0
  %475 = vmatmul.mubr.bf16.gmra.mrb[0].mxu0 %v292
  %v476 = vpop.f32.mrb[0].mxu0
  %v477 = vadd.f32 0.0, %v476
  %v478 = vpop.f32.mrb[0].mxu0
  %v479 = vpop.f32.mrb[0].mxu0
  %v480 = vadd.f32 0.0, %v479
  %v481 = vpop.f32.mrb[0].mxu0
  %482 = vmatprep.mubr.bf16.mxu0 0
  %483 = vmatmul.mubr.bf16.gmra.mrb[0].mxu0 %v295
  %v484 = vpop.f32.mrb[0].mxu0
  %v485 = vadd.f32 0.0, %v484
  %v486 = vpop.f32.mrb[0].mxu0
  %v487 = vpop.f32.mrb[0].mxu0
  %v488 = vadd.f32 0.0, %v487
  %v489 = vpop.f32.mrb[0].mxu0
  %490 = vmatprep.mubr.bf16.mxu0 0
  %491 = vmatmul.mubr.bf16.gmra.mrb[0].mxu0 %v298
  %v492 = vpop.f32.mrb[0].mxu0
  %v493 = vadd.f32 0.0, %v492
  %v494 = vpop.f32.mrb[0].mxu0
  %v495 = vpop.f32.mrb[0].mxu0
  %v496 = vadd.f32 0.0, %v495
  %v497 = vpop.f32.mrb[0].mxu0
  %498 = vmatprep.mubr.bf16.mxu0 0
  %499 = vmatmul.mubr.bf16.gmra.mrb[0].mxu0 %v301
  %v500 = vpop.f32.mrb[0].mxu0
  %v501 = vadd.f32 0.0, %v500
  %v502 = vpop.f32.mrb[0].mxu0
  %v503 = vpop.f32.mrb[0].mxu0
  %v504 = vadd.f32 0.0, %v503
  %v505 = vpop.f32.mrb[0].mxu0
  %506 = vmatprep.mubr.bf16.mxu0 0
  %507 = vmatmul.mubr.bf16.gmra.mrb[0].mxu0 %v304
  %v508 = vpop.f32.mrb[0].mxu0
  %v509 = vadd.f32 0.0, %v508
  %v510 = vpop.f32.mrb[0].mxu0
  %v511 = vpop.f32.mrb[0].mxu0
  %v512 = vadd.f32 0.0, %v511
  %v513 = vpop.f32.mrb[0].mxu0
  %514 = vmatprep.mubr.bf16.mxu0 0
  %515 = vmatmul.mubr.bf16.gmra.mrb[0].mxu0 %v307
  %v516 = vpop.f32.mrb[0].mxu0
  %v517 = vadd.f32 0.0, %v516
  %v518 = vpop.f32.mrb[0].mxu0
  %v519 = vpop.f32.mrb[0].mxu0
  %v520 = vadd.f32 0.0, %v519
  %v521 = vpop.f32.mrb[0].mxu0
  %522 = vmatprep.mubr.bf16.mxu0 0
  %523 = vmatmul.mubr.bf16.gmra.mrb[0].mxu0 %v310
  %v524 = vpop.f32.mrb[0].mxu0
  %v525 = vadd.f32 0.0, %v524
  %v526 = vpop.f32.mrb[0].mxu0
  %v527 = vpop.f32.mrb[0].mxu0
  %v528 = vadd.f32 0.0, %v527
  %v529 = vpop.f32.mrb[0].mxu0
  %530 = vmatprep.mubr.bf16.mxu0 0
  %531 = vmatmul.mubr.bf16.gmra.mrb[0].mxu0 %v313
  %v532 = vpop.f32.mrb[0].mxu0
  %v533 = vadd.f32 0.0, %v532
  %v534 = vpop.f32.mrb[0].mxu0
  %v535 = vpop.f32.mrb[0].mxu0
  %v536 = vadd.f32 0.0, %v535
  %v537 = vpop.f32.mrb[0].mxu0
  %538 = vmatprep.mubr.bf16.mxu0 0
  %539 = vmatmul.mubr.bf16.gmra.mrb[0].mxu0 %v316
  %v540 = vpop.f32.mrb[0].mxu0
  %v541 = vadd.f32 0.0, %v540
  %v542 = vpop.f32.mrb[0].mxu0
  %v543 = vpop.f32.mrb[0].mxu0
  %v544 = vadd.f32 0.0, %v543
  %v545 = vpop.f32.mrb[0].mxu0
  %546 = vmatprep.mubr.bf16.mxu0 0
  %547 = vmatmul.mubr.bf16.gmra.mrb[0].mxu0 %v319
  %v548 = vpop.f32.mrb[0].mxu0
  %v549 = vadd.f32 0.0, %v548
  %v550 = vpop.f32.mrb[0].mxu0
  %v551 = vpop.f32.mrb[0].mxu0
  %v552 = vadd.f32 0.0, %v551
  %v553 = vpop.f32.mrb[0].mxu0
  %554 = vmatprep.mubr.bf16.mxu0 0
  %555 = vmatmul.mubr.bf16.gmra.mrb[0].mxu0 %v322
  %v556 = vpop.f32.mrb[0].mxu0
  %v557 = vadd.f32 0.0, %v556
  %v558 = vpop.f32.mrb[0].mxu0
  %v559 = vpop.f32.mrb[0].mxu0
  %v560 = vadd.f32 0.0, %v559
  %v561 = vpop.f32.mrb[0].mxu0
  %562 = vmatprep.mubr.bf16.mxu0 0
  %563 = vmatmul.mubr.bf16.gmra.mrb[0].mxu0 %v325
  %v564 = vpop.f32.mrb[0].mxu0
  %v565 = vadd.f32 0.0, %v564
  %v566 = vpop.f32.mrb[0].mxu0
  %v567 = vpop.f32.mrb[0].mxu0
  %v568 = vadd.f32 0.0, %v567
  %v569 = vpop.f32.mrb[0].mxu0
  %570 = vmatprep.mubr.bf16.mxu0 0
  %571 = vmatmul.mubr.bf16.gmra.mrb[0].mxu0 %v328
  %v572 = vpop.f32.mrb[0].mxu0
  %v573 = vadd.f32 0.0, %v572
  %v574 = vpop.f32.mrb[0].mxu0
  %v575 = vpop.f32.mrb[0].mxu0
  %v576 = vadd.f32 0.0, %v575
  %v577 = vpop.f32.mrb[0].mxu0
  %578 = vmatprep.mubr.bf16.mxu0 0
  %579 = vmatmul.mubr.bf16.gmra.mrb[0].mxu0 %v331
  %v580 = vpop.f32.mrb[0].mxu0
  %v581 = vadd.f32 0.0, %v580
  %v582 = vpop.f32.mrb[0].mxu0
  %v583 = vpop.f32.mrb[0].mxu0
  %v584 = vadd.f32 0.0, %v583
  %v585 = vpop.f32.mrb[0].mxu0
  %586 = vmatprep.mubr.bf16.mxu0 0
  %587 = vmatmul.mubr.bf16.gmra.mrb[0].mxu0 %v334
  %v588 = vpop.f32.mrb[0].mxu0
  %v589 = vadd.f32 0.0, %v588
  %v590 = vpop.f32.mrb[0].mxu0
  %v591 = vpop.f32.mrb[0].mxu0
  %v592 = vadd.f32 0.0, %v591
  %v593 = vpop.f32.mrb[0].mxu0
  %594 = vmatprep.mubr.bf16.mxu0 0
  %595 = vmatmul.mubr.bf16.gmra.mrb[0].mxu0 %v337
  %v596 = vpop.f32.mrb[0].mxu0
  %v597 = vadd.f32 0.0, %v596
  %v598 = vpop.f32.mrb[0].mxu0
  %v599 = vpop.f32.mrb[0].mxu0
  %v600 = vadd.f32 0.0, %v599
  %v601 = vpop.f32.mrb[0].mxu0
  %602 = vmatprep.mubr.bf16.mxu0 0
  %603 = vmatmul.mubr.bf16.gmra.mrb[0].mxu0 %v340
  %v604 = vpop.f32.mrb[0].mxu0
  %v605 = vadd.f32 0.0, %v604
  %v606 = vpop.f32.mrb[0].mxu0
  %v607 = vpop.f32.mrb[0].mxu0
  %v608 = vadd.f32 0.0, %v607
  %v609 = vpop.f32.mrb[0].mxu0
  %610 = vmatprep.mubr.bf16.mxu0 0
  %611 = vmatmul.mubr.bf16.gmra.mrb[0].mxu0 %v343
  %v612 = vpop.f32.mrb[0].mxu0
  %v613 = vadd.f32 0.0, %v612
  %v614 = vpop.f32.mrb[0].mxu0
  %v615 = vpop.f32.mrb[0].mxu0
  %v616 = vadd.f32 0.0, %v615
  %v617 = vpop.f32.mrb[0].mxu0
  %618 = vmatprep.mubr.bf16.mxu0 0
  %619 = vmatmul.mubr.bf16.gmra.mrb[0].mxu0 %v346
  %v620 = vpop.f32.mrb[0].mxu0
  %v621 = vadd.f32 0.0, %v620
  %v622 = vpop.f32.mrb[0].mxu0
  %v623 = vpop.f32.mrb[0].mxu0
  %v624 = vadd.f32 0.0, %v623
  %v625 = vpop.f32.mrb[0].mxu0
  %626 = vmatprep.mubr.bf16.mxu0 0
  %627 = vmatmul.mubr.bf16.gmra.mrb[0].mxu0 %v349
  %v628 = vpop.f32.mrb[0].mxu0
  %v629 = vadd.f32 0.0, %v628
  %v630 = vpop.f32.mrb[0].mxu0
  %v631 = vpop.f32.mrb[0].mxu0
  %v632 = vadd.f32 0.0, %v631
  %v633 = vpop.f32.mrb[0].mxu0
  %634 = vmatprep.mubr.bf16.mxu0 0
  %635 = vmatmul.mubr.bf16.gmra.mrb[0].mxu0 %v352
  %v636 = vpop.f32.mrb[0].mxu0
  %v637 = vadd.f32 0.0, %v636
  %v638 = vpop.f32.mrb[0].mxu0
  %v639 = vpop.f32.mrb[0].mxu0
  %v640 = vadd.f32 0.0, %v639
  %v641 = vpop.f32.mrb[0].mxu0
  %642 = vdwg.mxu0
  %v643 = vld [vmem:[%s2] sm:$0xff]
  %v644 = vld [vmem:[%s2 + $0x8] sm:$0xff]
  %vm645 = vcmask 130048
  %v647 = vsel %vm645, %v389, 0
  %v650 = vsel %vm645, %v392, 0
  %v653 = vsel %vm645, %v397, 0
  %v656 = vsel %vm645, %v400, 0
  %v659 = vsel %vm645, %v405, 0
  %v662 = vsel %vm645, %v408, 0
  %v665 = vsel %vm645, %v413, 0
  %v668 = vsel %vm645, %v416, 0
  %v671 = vsel %vm645, %v421, 0
  %v674 = vsel %vm645, %v424, 0
  %v677 = vsel %vm645, %v429, 0
  %v680 = vsel %vm645, %v432, 0
  %v683 = vsel %vm645, %v437, 0
  %v686 = vsel %vm645, %v440, 0
  %v689 = vsel %vm645, %v445, 0
  %v692 = vsel %vm645, %v448, 0
  %v695 = vsel %vm645, %v453, 0
  %v698 = vsel %vm645, %v456, 0
  %v701 = vsel %vm645, %v461, 0
  %v704 = vsel %vm645, %v464, 0
  %v707 = vsel %vm645, %v469, 0
  %v710 = vsel %vm645, %v472, 0
  %v713 = vsel %vm645, %v477, 0
  %v716 = vsel %vm645, %v480, 0
  %v719 = vsel %vm645, %v485, 0
  %v722 = vsel %vm645, %v488, 0
  %v725 = vsel %vm645, %v493, 0
  %v728 = vsel %vm645, %v496, 0
  %v731 = vsel %vm645, %v501, 0
  %v734 = vsel %vm645, %v504, 0
  %v737 = vsel %vm645, %v509, 0
  %v740 = vsel %vm645, %v512, 0
  %v743 = vsel %vm645, %v517, 0
  %v746 = vsel %vm645, %v520, 0
  %v749 = vsel %vm645, %v525, 0
  %v752 = vsel %vm645, %v528, 0
  %v755 = vsel %vm645, %v533, 0
  %v758 = vsel %vm645, %v536, 0
  %v761 = vsel %vm645, %v541, 0
  %v764 = vsel %vm645, %v544, 0
  %v767 = vsel %vm645, %v549, 0
  %v770 = vsel %vm645, %v552, 0
  %v773 = vsel %vm645, %v557, 0
  %v776 = vsel %vm645, %v560, 0
  %v779 = vsel %vm645, %v565, 0
  %v782 = vsel %vm645, %v568, 0
  %v785 = vsel %vm645, %v573, 0
  %v788 = vsel %vm645, %v576, 0
  %v791 = vsel %vm645, %v581, 0
  %v794 = vsel %vm645, %v584, 0
  %v797 = vsel %vm645, %v589, 0
  %v800 = vsel %vm645, %v592, 0
  %v803 = vsel %vm645, %v597, 0
  %v806 = vsel %vm645, %v600, 0
  %v809 = vsel %vm645, %v605, 0
  %v812 = vsel %vm645, %v608, 0
  %v815 = vsel %vm645, %v613, 0
  %v818 = vsel %vm645, %v616, 0
  %v821 = vsel %vm645, %v621, 0
  %v824 = vsel %vm645, %v624, 0
  %v827 = vsel %vm645, %v629, 0
  %v830 = vsel %vm645, %v632, 0
  %v833 = vsel %vm645, %v637, 0
  %v836 = vsel %vm645, %v640, 0
  %838 = vmatprep.subr.mxu0 0.0
  %839 = vmatpush1.msra.mxu0 %v643
  %840 = vmatprep.subr.mxu0 0.0
  %841 = vmatpush1.msra.mxu0 %v644
  %842 = vmatprep.subr.mxu0 0.0
  %843 = vmatpush1.msra.mxu0 0.0
  %844 = vmatprep.subr.mxu0 0.0
  %845 = vmatpush1.msra.mxu0 0.0
  %846 = vmatprep.subr.mxu0 0.0
  %847 = vmatpush1.msra.mxu0 0.0
  %848 = vmatprep.subr.mxu0 0.0
  %849 = vmatpush1.msra.mxu0 0.0
  %850 = vmatprep.subr.mxu0 0.0
  %851 = vmatpush1.msra.mxu0 0.0
  %852 = vmatprep.subr.mxu0 0.0
  %853 = vmatpush1.msra.mxu0 0.0
  %854 = vmatprep.subr.mxu0 0.0
  %855 = vmatpush1.msra.mxu0 0.0
  %856 = vmatprep.subr.mxu0 0.0
  %857 = vmatpush1.msra.mxu0 0.0
  %858 = vmatprep.subr.mxu0 0.0
  %859 = vmatpush1.msra.mxu0 0.0
  %860 = vmatprep.subr.mxu0 0.0
  %861 = vmatpush1.msra.mxu0 0.0
  %862 = vmatprep.subr.mxu0 0.0
  %863 = vmatpush1.msra.mxu0 0.0
  %864 = vmatprep.subr.mxu0 0.0
  %865 = vmatpush1.msra.mxu0 0.0
  %866 = vmatprep.subr.mxu0 0.0
  %867 = vmatpush1.msra.mxu0 0.0
  %868 = vmatprep.subr.mxu0 0.0
  %869 = vmatpush1.msra.mxu0 0.0
  %870 = vmatprep.subr.mxu0 0.0
  %871 = vmatpush1.msra.mxu0 0.0
  %872 = vmatprep.subr.mxu0 0.0
  %873 = vmatpush1.msra.mxu0 0.0
  %874 = vmatprep.subr.mxu0 0.0
  %875 = vmatpush1.msra.mxu0 0.0
  %876 = vmatprep.subr.mxu0 0.0
  %877 = vmatpush1.msra.mxu0 0.0
  %878 = vmatprep.subr.mxu0 0.0
  %879 = vmatpush1.msra.mxu0 0.0
  %880 = vmatprep.subr.mxu0 0.0
  %881 = vmatpush1.msra.mxu0 0.0
  %882 = vmatprep.subr.mxu0 0.0
  %883 = vmatpush1.msra.mxu0 0.0
  %884 = vmatprep.subr.mxu0 0.0
  %885 = vmatpush1.msra.mxu0 0.0
  %886 = vmatprep.subr.mxu0 0.0
  %887 = vmatpush1.msra.mxu0 0.0
  %888 = vmatprep.subr.mxu0 0.0
  %889 = vmatpush1.msra.mxu0 0.0
  %890 = vmatprep.subr.mxu0 0.0
  %891 = vmatpush1.msra.mxu0 0.0
  %892 = vmatprep.subr.mxu0 0.0
  %893 = vmatpush1.msra.mxu0 0.0
  %894 = vmatprep.subr.mxu0 0.0
  %895 = vmatpush1.msra.mxu0 0.0
  %896 = vmatprep.subr.mxu0 0.0
  %897 = vmatpush1.msra.mxu0 0.0
  %898 = vmatprep.subr.mxu0 0.0
  %899 = vmatpush1.msra.mxu0 0.0
  %900 = vmatprep.subr.mxu0 0.0
  %901 = vmatpush1.msra.mxu0 0.0
  %902 = vmatprep.mubr.f32.mxu0 0.0
  %903 = vmatmul.mubr.f32.gmra.mrb[0].mxu0 %v647
  %v904 = vpop.f32.mrb[0].mxu0
  %v905 = vadd.f32 0.0, %v904
  %v906 = vpop.f32.mrb[0].mxu0
  %907 = vmatprep.mubr.f32.mxu0 0.0
  %908 = vmatmul.mubr.f32.gmra.mrb[0].mxu0 %v650
  %v909 = vpop.f32.mrb[0].mxu0
  %v910 = vadd.f32 0.0, %v909
  %v911 = vpop.f32.mrb[0].mxu0
  %912 = vmatprep.mubr.f32.mxu0 0.0
  %913 = vmatmul.mubr.f32.gmra.mrb[0].mxu0 %v653
  %v914 = vpop.f32.mrb[0].mxu0
  %v915 = vadd.f32 0.0, %v914
  %v916 = vpop.f32.mrb[0].mxu0
  %917 = vmatprep.mubr.f32.mxu0 0.0
  %918 = vmatmul.mubr.f32.gmra.mrb[0].mxu0 %v656
  %v919 = vpop.f32.mrb[0].mxu0
  %v920 = vadd.f32 0.0, %v919
  %v921 = vpop.f32.mrb[0].mxu0
  %922 = vmatprep.mubr.f32.mxu0 0.0
  %923 = vmatmul.mubr.f32.gmra.mrb[0].mxu0 %v659
  %v924 = vpop.f32.mrb[0].mxu0
  %v925 = vadd.f32 0.0, %v924
  %v926 = vpop.f32.mrb[0].mxu0
  %927 = vmatprep.mubr.f32.mxu0 0.0
  %928 = vmatmul.mubr.f32.gmra.mrb[0].mxu0 %v662
  %v929 = vpop.f32.mrb[0].mxu0
  %v930 = vadd.f32 0.0, %v929
  %v931 = vpop.f32.mrb[0].mxu0
  %932 = vmatprep.mubr.f32.mxu0 0.0
  %933 = vmatmul.mubr.f32.gmra.mrb[0].mxu0 %v665
  %v934 = vpop.f32.mrb[0].mxu0
  %v935 = vadd.f32 0.0, %v934
  %v936 = vpop.f32.mrb[0].mxu0
  %937 = vmatprep.mubr.f32.mxu0 0.0
  %938 = vmatmul.mubr.f32.gmra.mrb[0].mxu0 %v668
  %v939 = vpop.f32.mrb[0].mxu0
  %v940 = vadd.f32 0.0, %v939
  %v941 = vpop.f32.mrb[0].mxu0
  %942 = vmatprep.mubr.f32.mxu0 0.0
  %943 = vmatmul.mubr.f32.gmra.mrb[0].mxu0 %v671
  %v944 = vpop.f32.mrb[0].mxu0
  %v945 = vadd.f32 0.0, %v944
  %v946 = vpop.f32.mrb[0].mxu0
  %947 = vmatprep.mubr.f32.mxu0 0.0
  %948 = vmatmul.mubr.f32.gmra.mrb[0].mxu0 %v674
  %v949 = vpop.f32.mrb[0].mxu0
  %v950 = vadd.f32 0.0, %v949
  %v951 = vpop.f32.mrb[0].mxu0
  %952 = vmatprep.mubr.f32.mxu0 0.0
  %953 = vmatmul.mubr.f32.gmra.mrb[0].mxu0 %v677
  %v954 = vpop.f32.mrb[0].mxu0
  %v955 = vadd.f32 0.0, %v954
  %v956 = vpop.f32.mrb[0].mxu0
  %957 = vmatprep.mubr.f32.mxu0 0.0
  %958 = vmatmul.mubr.f32.gmra.mrb[0].mxu0 %v680
  %v959 = vpop.f32.mrb[0].mxu0
  %v960 = vadd.f32 0.0, %v959
  %v961 = vpop.f32.mrb[0].mxu0
  %962 = vmatprep.mubr.f32.mxu0 0.0
  %963 = vmatmul.mubr.f32.gmra.mrb[0].mxu0 %v683
  %v964 = vpop.f32.mrb[0].mxu0
  %v965 = vadd.f32 0.0, %v964
  %v966 = vpop.f32.mrb[0].mxu0
  %967 = vmatprep.mubr.f32.mxu0 0.0
  %968 = vmatmul.mubr.f32.gmra.mrb[0].mxu0 %v686
  %v969 = vpop.f32.mrb[0].mxu0
  %v970 = vadd.f32 0.0, %v969
  %v971 = vpop.f32.mrb[0].mxu0
  %972 = vmatprep.mubr.f32.mxu0 0.0
  %973 = vmatmul.mubr.f32.gmra.mrb[0].mxu0 %v689
  %v974 = vpop.f32.mrb[0].mxu0
  %v975 = vadd.f32 0.0, %v974
  %v976 = vpop.f32.mrb[0].mxu0
  %977 = vmatprep.mubr.f32.mxu0 0.0
  %978 = vmatmul.mubr.f32.gmra.mrb[0].mxu0 %v692
  %v979 = vpop.f32.mrb[0].mxu0
  %v980 = vadd.f32 0.0, %v979
  %v981 = vpop.f32.mrb[0].mxu0
  %982 = vmatprep.mubr.f32.mxu0 0.0
  %983 = vmatmul.mubr.f32.gmra.mrb[0].mxu0 %v695
  %v984 = vpop.f32.mrb[0].mxu0
  %v985 = vadd.f32 0.0, %v984
  %v986 = vpop.f32.mrb[0].mxu0
  %987 = vmatprep.mubr.f32.mxu0 0.0
  %988 = vmatmul.mubr.f32.gmra.mrb[0].mxu0 %v698
  %v989 = vpop.f32.mrb[0].mxu0
  %v990 = vadd.f32 0.0, %v989
  %v991 = vpop.f32.mrb[0].mxu0
  %992 = vmatprep.mubr.f32.mxu0 0.0
  %993 = vmatmul.mubr.f32.gmra.mrb[0].mxu0 %v701
  %v994 = vpop.f32.mrb[0].mxu0
  %v995 = vadd.f32 0.0, %v994
  %v996 = vpop.f32.mrb[0].mxu0
  %997 = vmatprep.mubr.f32.mxu0 0.0
  %998 = vmatmul.mubr.f32.gmra.mrb[0].mxu0 %v704
  %v999 = vpop.f32.mrb[0].mxu0
  %v1000 = vadd.f32 0.0, %v999
  %v1001 = vpop.f32.mrb[0].mxu0
  %1002 = vmatprep.mubr.f32.mxu0 0.0
  %1003 = vmatmul.mubr.f32.gmra.mrb[0].mxu0 %v707
  %v1004 = vpop.f32.mrb[0].mxu0
  %v1005 = vadd.f32 0.0, %v1004
  %v1006 = vpop.f32.mrb[0].mxu0
  %1007 = vmatprep.mubr.f32.mxu0 0.0
  %1008 = vmatmul.mubr.f32.gmra.mrb[0].mxu0 %v710
  %v1009 = vpop.f32.mrb[0].mxu0
  %v1010 = vadd.f32 0.0, %v1009
  %v1011 = vpop.f32.mrb[0].mxu0
  %1012 = vmatprep.mubr.f32.mxu0 0.0
  %1013 = vmatmul.mubr.f32.gmra.mrb[0].mxu0 %v713
  %v1014 = vpop.f32.mrb[0].mxu0
  %v1015 = vadd.f32 0.0, %v1014
  %v1016 = vpop.f32.mrb[0].mxu0
  %1017 = vmatprep.mubr.f32.mxu0 0.0
  %1018 = vmatmul.mubr.f32.gmra.mrb[0].mxu0 %v716
  %v1019 = vpop.f32.mrb[0].mxu0
  %v1020 = vadd.f32 0.0, %v1019
  %v1021 = vpop.f32.mrb[0].mxu0
  %1022 = vmatprep.mubr.f32.mxu0 0.0
  %1023 = vmatmul.mubr.f32.gmra.mrb[0].mxu0 %v719
  %v1024 = vpop.f32.mrb[0].mxu0
  %v1025 = vadd.f32 0.0, %v1024
  %v1026 = vpop.f32.mrb[0].mxu0
  %1027 = vmatprep.mubr.f32.mxu0 0.0
  %1028 = vmatmul.mubr.f32.gmra.mrb[0].mxu0 %v722
  %v1029 = vpop.f32.mrb[0].mxu0
  %v1030 = vadd.f32 0.0, %v1029
  %v1031 = vpop.f32.mrb[0].mxu0
  %1032 = vmatprep.mubr.f32.mxu0 0.0
  %1033 = vmatmul.mubr.f32.gmra.mrb[0].mxu0 %v725
  %v1034 = vpop.f32.mrb[0].mxu0
  %v1035 = vadd.f32 0.0, %v1034
  %v1036 = vpop.f32.mrb[0].mxu0
  %1037 = vmatprep.mubr.f32.mxu0 0.0
  %1038 = vmatmul.mubr.f32.gmra.mrb[0].mxu0 %v728
  %v1039 = vpop.f32.mrb[0].mxu0
  %v1040 = vadd.f32 0.0, %v1039
  %v1041 = vpop.f32.mrb[0].mxu0
  %1042 = vmatprep.mubr.f32.mxu0 0.0
  %1043 = vmatmul.mubr.f32.gmra.mrb[0].mxu0 %v731
  %v1044 = vpop.f32.mrb[0].mxu0
  %v1045 = vadd.f32 0.0, %v1044
  %v1046 = vpop.f32.mrb[0].mxu0
  %1047 = vmatprep.mubr.f32.mxu0 0.0
  %1048 = vmatmul.mubr.f32.gmra.mrb[0].mxu0 %v734
  %v1049 = vpop.f32.mrb[0].mxu0
  %v1050 = vadd.f32 0.0, %v1049
  %v1051 = vpop.f32.mrb[0].mxu0
  %1052 = vmatprep.mubr.f32.mxu0 0.0
  %1053 = vmatmul.mubr.f32.gmra.mrb[0].mxu0 %v737
  %v1054 = vpop.f32.mrb[0].mxu0
  %v1055 = vadd.f32 0.0, %v1054
  %v1056 = vpop.f32.mrb[0].mxu0
  %1057 = vmatprep.mubr.f32.mxu0 0.0
  %1058 = vmatmul.mubr.f32.gmra.mrb[0].mxu0 %v740
  %v1059 = vpop.f32.mrb[0].mxu0
  %v1060 = vadd.f32 0.0, %v1059
  %v1061 = vpop.f32.mrb[0].mxu0
  %1062 = vmatprep.mubr.f32.mxu0 0.0
  %1063 = vmatmul.mubr.f32.gmra.mrb[0].mxu0 %v743
  %v1064 = vpop.f32.mrb[0].mxu0
  %v1065 = vadd.f32 0.0, %v1064
  %v1066 = vpop.f32.mrb[0].mxu0
  %1067 = vmatprep.mubr.f32.mxu0 0.0
  %1068 = vmatmul.mubr.f32.gmra.mrb[0].mxu0 %v746
  %v1069 = vpop.f32.mrb[0].mxu0
  %v1070 = vadd.f32 0.0, %v1069
  %v1071 = vpop.f32.mrb[0].mxu0
  %1072 = vmatprep.mubr.f32.mxu0 0.0
  %1073 = vmatmul.mubr.f32.gmra.mrb[0].mxu0 %v749
  %v1074 = vpop.f32.mrb[0].mxu0
  %v1075 = vadd.f32 0.0, %v1074
  %v1076 = vpop.f32.mrb[0].mxu0
  %1077 = vmatprep.mubr.f32.mxu0 0.0
  %1078 = vmatmul.mubr.f32.gmra.mrb[0].mxu0 %v752
  %v1079 = vpop.f32.mrb[0].mxu0
  %v1080 = vadd.f32 0.0, %v1079
  %v1081 = vpop.f32.mrb[0].mxu0
  %1082 = vmatprep.mubr.f32.mxu0 0.0
  %1083 = vmatmul.mubr.f32.gmra.mrb[0].mxu0 %v755
  %v1084 = vpop.f32.mrb[0].mxu0
  %v1085 = vadd.f32 0.0, %v1084
  %v1086 = vpop.f32.mrb[0].mxu0
  %1087 = vmatprep.mubr.f32.mxu0 0.0
  %1088 = vmatmul.mubr.f32.gmra.mrb[0].mxu0 %v758
  %v1089 = vpop.f32.mrb[0].mxu0
  %v1090 = vadd.f32 0.0, %v1089
  %v1091 = vpop.f32.mrb[0].mxu0
  %1092 = vmatprep.mubr.f32.mxu0 0.0
  %1093 = vmatmul.mubr.f32.gmra.mrb[0].mxu0 %v761
  %v1094 = vpop.f32.mrb[0].mxu0
  %v1095 = vadd.f32 0.0, %v1094
  %v1096 = vpop.f32.mrb[0].mxu0
  %1097 = vmatprep.mubr.f32.mxu0 0.0
  %1098 = vmatmul.mubr.f32.gmra.mrb[0].mxu0 %v764
  %v1099 = vpop.f32.mrb[0].mxu0
  %v1100 = vadd.f32 0.0, %v1099
  %v1101 = vpop.f32.mrb[0].mxu0
  %1102 = vmatprep.mubr.f32.mxu0 0.0
  %1103 = vmatmul.mubr.f32.gmra.mrb[0].mxu0 %v767
  %v1104 = vpop.f32.mrb[0].mxu0
  %v1105 = vadd.f32 0.0, %v1104
  %v1106 = vpop.f32.mrb[0].mxu0
  %1107 = vmatprep.mubr.f32.mxu0 0.0
  %1108 = vmatmul.mubr.f32.gmra.mrb[0].mxu0 %v770
  %v1109 = vpop.f32.mrb[0].mxu0
  %v1110 = vadd.f32 0.0, %v1109
  %v1111 = vpop.f32.mrb[0].mxu0
  %1112 = vmatprep.mubr.f32.mxu0 0.0
  %1113 = vmatmul.mubr.f32.gmra.mrb[0].mxu0 %v773
  %v1114 = vpop.f32.mrb[0].mxu0
  %v1115 = vadd.f32 0.0, %v1114
  %v1116 = vpop.f32.mrb[0].mxu0
  %1117 = vmatprep.mubr.f32.mxu0 0.0
  %1118 = vmatmul.mubr.f32.gmra.mrb[0].mxu0 %v776
  %v1119 = vpop.f32.mrb[0].mxu0
  %v1120 = vadd.f32 0.0, %v1119
  %v1121 = vpop.f32.mrb[0].mxu0
  %1122 = vmatprep.mubr.f32.mxu0 0.0
  %1123 = vmatmul.mubr.f32.gmra.mrb[0].mxu0 %v779
  %v1124 = vpop.f32.mrb[0].mxu0
  %v1125 = vadd.f32 0.0, %v1124
  %v1126 = vpop.f32.mrb[0].mxu0
  %1127 = vmatprep.mubr.f32.mxu0 0.0
  %1128 = vmatmul.mubr.f32.gmra.mrb[0].mxu0 %v782
  %v1129 = vpop.f32.mrb[0].mxu0
  %v1130 = vadd.f32 0.0, %v1129
  %v1131 = vpop.f32.mrb[0].mxu0
  %1132 = vmatprep.mubr.f32.mxu0 0.0
  %1133 = vmatmul.mubr.f32.gmra.mrb[0].mxu0 %v785
  %v1134 = vpop.f32.mrb[0].mxu0
  %v1135 = vadd.f32 0.0, %v1134
  %v1136 = vpop.f32.mrb[0].mxu0
  %1137 = vmatprep.mubr.f32.mxu0 0.0
  %1138 = vmatmul.mubr.f32.gmra.mrb[0].mxu0 %v788
  %v1139 = vpop.f32.mrb[0].mxu0
  %v1140 = vadd.f32 0.0, %v1139
  %v1141 = vpop.f32.mrb[0].mxu0
  %1142 = vmatprep.mubr.f32.mxu0 0.0
  %1143 = vmatmul.mubr.f32.gmra.mrb[0].mxu0 %v791
  %v1144 = vpop.f32.mrb[0].mxu0
  %v1145 = vadd.f32 0.0, %v1144
  %v1146 = vpop.f32.mrb[0].mxu0
  %1147 = vmatprep.mubr.f32.mxu0 0.0
  %1148 = vmatmul.mubr.f32.gmra.mrb[0].mxu0 %v794
  %v1149 = vpop.f32.mrb[0].mxu0
  %v1150 = vadd.f32 0.0, %v1149
  %v1151 = vpop.f32.mrb[0].mxu0
  %1152 = vmatprep.mubr.f32.mxu0 0.0
  %1153 = vmatmul.mubr.f32.gmra.mrb[0].mxu0 %v797
  %v1154 = vpop.f32.mrb[0].mxu0
  %v1155 = vadd.f32 0.0, %v1154
  %v1156 = vpop.f32.mrb[0].mxu0
  %1157 = vmatprep.mubr.f32.mxu0 0.0
  %1158 = vmatmul.mubr.f32.gmra.mrb[0].mxu0 %v800
  %v1159 = vpop.f32.mrb[0].mxu0
  %v1160 = vadd.f32 0.0, %v1159
  %v1161 = vpop.f32.mrb[0].mxu0
  %1162 = vmatprep.mubr.f32.mxu0 0.0
  %1163 = vmatmul.mubr.f32.gmra.mrb[0].mxu0 %v803
  %v1164 = vpop.f32.mrb[0].mxu0
  %v1165 = vadd.f32 0.0, %v1164
  %v1166 = vpop.f32.mrb[0].mxu0
  %1167 = vmatprep.mubr.f32.mxu0 0.0
  %1168 = vmatmul.mubr.f32.gmra.mrb[0].mxu0 %v806
  %v1169 = vpop.f32.mrb[0].mxu0
  %v1170 = vadd.f32 0.0, %v1169
  %v1171 = vpop.f32.mrb[0].mxu0
  %1172 = vmatprep.mubr.f32.mxu0 0.0
  %1173 = vmatmul.mubr.f32.gmra.mrb[0].mxu0 %v809
  %v1174 = vpop.f32.mrb[0].mxu0
  %v1175 = vadd.f32 0.0, %v1174
  %v1176 = vpop.f32.mrb[0].mxu0
  %1177 = vmatprep.mubr.f32.mxu0 0.0
  %1178 = vmatmul.mubr.f32.gmra.mrb[0].mxu0 %v812
  %v1179 = vpop.f32.mrb[0].mxu0
  %v1180 = vadd.f32 0.0, %v1179
  %v1181 = vpop.f32.mrb[0].mxu0
  %1182 = vmatprep.mubr.f32.mxu0 0.0
  %1183 = vmatmul.mubr.f32.gmra.mrb[0].mxu0 %v815
  %v1184 = vpop.f32.mrb[0].mxu0
  %v1185 = vadd.f32 0.0, %v1184
  %v1186 = vpop.f32.mrb[0].mxu0
  %1187 = vmatprep.mubr.f32.mxu0 0.0
  %1188 = vmatmul.mubr.f32.gmra.mrb[0].mxu0 %v818
  %v1189 = vpop.f32.mrb[0].mxu0
  %v1190 = vadd.f32 0.0, %v1189
  %v1191 = vpop.f32.mrb[0].mxu0
  %1192 = vmatprep.mubr.f32.mxu0 0.0
  %1193 = vmatmul.mubr.f32.gmra.mrb[0].mxu0 %v821
  %v1194 = vpop.f32.mrb[0].mxu0
  %v1195 = vadd.f32 0.0, %v1194
  %v1196 = vpop.f32.mrb[0].mxu0
  %1197 = vmatprep.mubr.f32.mxu0 0.0
  %1198 = vmatmul.mubr.f32.gmra.mrb[0].mxu0 %v824
  %v1199 = vpop.f32.mrb[0].mxu0
  %v1200 = vadd.f32 0.0, %v1199
  %v1201 = vpop.f32.mrb[0].mxu0
  %1202 = vmatprep.mubr.f32.mxu0 0.0
  %1203 = vmatmul.mubr.f32.gmra.mrb[0].mxu0 %v827
  %v1204 = vpop.f32.mrb[0].mxu0
  %v1205 = vadd.f32 0.0, %v1204
  %v1206 = vpop.f32.mrb[0].mxu0
  %1207 = vmatprep.mubr.f32.mxu0 0.0
  %1208 = vmatmul.mubr.f32.gmra.mrb[0].mxu0 %v830
  %v1209 = vpop.f32.mrb[0].mxu0
  %v1210 = vadd.f32 0.0, %v1209
  %v1211 = vpop.f32.mrb[0].mxu0
  %1212 = vmatprep.mubr.f32.mxu0 0.0
  %1213 = vmatmul.mubr.f32.gmra.mrb[0].mxu0 %v833
  %v1214 = vpop.f32.mrb[0].mxu0
  %v1215 = vadd.f32 0.0, %v1214
  %v1216 = vpop.f32.mrb[0].mxu0
  %1217 = vmatprep.mubr.f32.mxu0 0.0
  %1218 = vmatmul.mubr.f32.gmra.mrb[0].mxu0 %v836
  %v1219 = vpop.f32.mrb[0].mxu0
  %v1220 = vadd.f32 0.0, %v1219
  %v1221 = vpop.f32.mrb[0].mxu0
  %1222 = vdwg.mxu0
  %vm1223 = vcmask 15360
  %1224 = vst.msk [vmem:[%s4] sm:$0xff] %vm1223, %v905
  %1225 = vst.msk [vmem:[%s4 + $0x8] sm:$0xff] %vm1223, %v910
  %1226 = vst.msk [vmem:[%s4 + $0x10] sm:$0xff] %vm1223, %v915
  %1227 = vst.msk [vmem:[%s4 + $0x18] sm:$0xff] %vm1223, %v920
  %1228 = vst.msk [vmem:[%s4 + $0x20] sm:$0xff] %vm1223, %v925
  %1229 = vst.msk [vmem:[%s4 + $0x28] sm:$0xff] %vm1223, %v930
  %1230 = vst.msk [vmem:[%s4 + $0x30] sm:$0xff] %vm1223, %v935
  %1231 = vst.msk [vmem:[%s4 + $0x38] sm:$0xff] %vm1223, %v940
  %1232 = vst.msk [vmem:[%s4 + $0x40] sm:$0xff] %vm1223, %v945
  %1233 = vst.msk [vmem:[%s4 + $0x48] sm:$0xff] %vm1223, %v950
  %1234 = vst.msk [vmem:[%s4 + $0x50] sm:$0xff] %vm1223, %v955
  %1235 = vst.msk [vmem:[%s4 + $0x58] sm:$0xff] %vm1223, %v960
  %1236 = vst.msk [vmem:[%s4 + $0x60] sm:$0xff] %vm1223, %v965
  %1237 = vst.msk [vmem:[%s4 + $0x68] sm:$0xff] %vm1223, %v970
  %1238 = vst.msk [vmem:[%s4 + $0x70] sm:$0xff] %vm1223, %v975
  %1239 = vst.msk [vmem:[%s4 + $0x78] sm:$0xff] %vm1223, %v980
  %1240 = vst.msk [vmem:[%s4 + $0x80] sm:$0xff] %vm1223, %v985
  %1241 = vst.msk [vmem:[%s4 + $0x88] sm:$0xff] %vm1223, %v990
  %1242 = vst.msk [vmem:[%s4 + $0x90] sm:$0xff] %vm1223, %v995
  %1243 = vst.msk [vmem:[%s4 + $0x98] sm:$0xff] %vm1223, %v1000
  %1244 = vst.msk [vmem:[%s4 + $0xa0] sm:$0xff] %vm1223, %v1005
  %1245 = vst.msk [vmem:[%s4 + $0xa8] sm:$0xff] %vm1223, %v1010
  %1246 = vst.msk [vmem:[%s4 + $0xb0] sm:$0xff] %vm1223, %v1015
  %1247 = vst.msk [vmem:[%s4 + $0xb8] sm:$0xff] %vm1223, %v1020
  %1248 = vst.msk [vmem:[%s4 + $0xc0] sm:$0xff] %vm1223, %v1025
  %1249 = vst.msk [vmem:[%s4 + $0xc8] sm:$0xff] %vm1223, %v1030
  %1250 = vst.msk [vmem:[%s4 + $0xd0] sm:$0xff] %vm1223, %v1035
  %1251 = vst.msk [vmem:[%s4 + $0xd8] sm:$0xff] %vm1223, %v1040
  %1252 = vst.msk [vmem:[%s4 + $0xe0] sm:$0xff] %vm1223, %v1045
  %1253 = vst.msk [vmem:[%s4 + $0xe8] sm:$0xff] %vm1223, %v1050
  %1254 = vst.msk [vmem:[%s4 + $0xf0] sm:$0xff] %vm1223, %v1055
  %1255 = vst.msk [vmem:[%s4 + $0xf8] sm:$0xff] %vm1223, %v1060
  %1256 = vst.msk [vmem:[%s4 + $0x100] sm:$0xff] %vm1223, %v1065
  %1257 = vst.msk [vmem:[%s4 + $0x108] sm:$0xff] %vm1223, %v1070
  %1258 = vst.msk [vmem:[%s4 + $0x110] sm:$0xff] %vm1223, %v1075
  %1259 = vst.msk [vmem:[%s4 + $0x118] sm:$0xff] %vm1223, %v1080
  %1260 = vst.msk [vmem:[%s4 + $0x120] sm:$0xff] %vm1223, %v1085
  %1261 = vst.msk [vmem:[%s4 + $0x128] sm:$0xff] %vm1223, %v1090
  %1262 = vst.msk [vmem:[%s4 + $0x130] sm:$0xff] %vm1223, %v1095
  %1263 = vst.msk [vmem:[%s4 + $0x138] sm:$0xff] %vm1223, %v1100
  %1264 = vst.msk [vmem:[%s4 + $0x140] sm:$0xff] %vm1223, %v1105
  %1265 = vst.msk [vmem:[%s4 + $0x148] sm:$0xff] %vm1223, %v1110
  %1266 = vst.msk [vmem:[%s4 + $0x150] sm:$0xff] %vm1223, %v1115
  %1267 = vst.msk [vmem:[%s4 + $0x158] sm:$0xff] %vm1223, %v1120
  %1268 = vst.msk [vmem:[%s4 + $0x160] sm:$0xff] %vm1223, %v1125
  %1269 = vst.msk [vmem:[%s4 + $0x168] sm:$0xff] %vm1223, %v1130
  %1270 = vst.msk [vmem:[%s4 + $0x170] sm:$0xff] %vm1223, %v1135
  %1271 = vst.msk [vmem:[%s4 + $0x178] sm:$0xff] %vm1223, %v1140
  %1272 = vst.msk [vmem:[%s4 + $0x180] sm:$0xff] %vm1223, %v1145
  %1273 = vst.msk [vmem:[%s4 + $0x188] sm:$0xff] %vm1223, %v1150
  %1274 = vst.msk [vmem:[%s4 + $0x190] sm:$0xff] %vm1223, %v1155
  %1275 = vst.msk [vmem:[%s4 + $0x198] sm:$0xff] %vm1223, %v1160
  %1276 = vst.msk [vmem:[%s4 + $0x1a0] sm:$0xff] %vm1223, %v1165
  %1277 = vst.msk [vmem:[%s4 + $0x1a8] sm:$0xff] %vm1223, %v1170
  %1278 = vst.msk [vmem:[%s4 + $0x1b0] sm:$0xff] %vm1223, %v1175
  %1279 = vst.msk [vmem:[%s4 + $0x1b8] sm:$0xff] %vm1223, %v1180
  %1280 = vst.msk [vmem:[%s4 + $0x1c0] sm:$0xff] %vm1223, %v1185
  %1281 = vst.msk [vmem:[%s4 + $0x1c8] sm:$0xff] %vm1223, %v1190
  %1282 = vst.msk [vmem:[%s4 + $0x1d0] sm:$0xff] %vm1223, %v1195
  %1283 = vst.msk [vmem:[%s4 + $0x1d8] sm:$0xff] %vm1223, %v1200
  %1284 = vst.msk [vmem:[%s4 + $0x1e0] sm:$0xff] %vm1223, %v1205
  %1285 = vst.msk [vmem:[%s4 + $0x1e8] sm:$0xff] %vm1223, %v1210
  %1286 = vst.msk [vmem:[%s4 + $0x1f0] sm:$0xff] %vm1223, %v1215
  %1287 = vst.msk [vmem:[%s4 + $0x1f8] sm:$0xff] %vm1223, %v1220
  %v1288 = vpack.c.bf16 %v392, %v389
  %v1289 = vpack.c.bf16 %v400, %v397
  %v1290 = vpack.c.bf16 %v408, %v405
  %v1291 = vpack.c.bf16 %v416, %v413
  %v1292 = vpack.c.bf16 %v424, %v421
  %v1293 = vpack.c.bf16 %v432, %v429
  %v1294 = vpack.c.bf16 %v440, %v437
  %v1295 = vpack.c.bf16 %v448, %v445
  %v1296 = vpack.c.bf16 %v456, %v453
  %v1297 = vpack.c.bf16 %v464, %v461
  %v1298 = vpack.c.bf16 %v472, %v469
  %v1299 = vpack.c.bf16 %v480, %v477
  %v1300 = vpack.c.bf16 %v488, %v485
  %v1301 = vpack.c.bf16 %v496, %v493
  %v1302 = vpack.c.bf16 %v504, %v501
  %v1303 = vpack.c.bf16 %v512, %v509
  %v1304 = vpack.c.bf16 %v520, %v517
  %v1305 = vpack.c.bf16 %v528, %v525
  %v1306 = vpack.c.bf16 %v536, %v533
  %v1307 = vpack.c.bf16 %v544, %v541
  %v1308 = vpack.c.bf16 %v552, %v549
  %v1309 = vpack.c.bf16 %v560, %v557
  %v1310 = vpack.c.bf16 %v568, %v565
  %v1311 = vpack.c.bf16 %v576, %v573
  %v1312 = vpack.c.bf16 %v584, %v581
  %v1313 = vpack.c.bf16 %v592, %v589
  %v1314 = vpack.c.bf16 %v600, %v597
  %v1315 = vpack.c.bf16 %v608, %v605
  %v1316 = vpack.c.bf16 %v616, %v613
  %v1317 = vpack.c.bf16 %v624, %v621
  %v1318 = vpack.c.bf16 %v632, %v629
  %v1319 = vpack.c.bf16 %v640, %v637
  %v1352 = vunpack.c.l.b16 %v1288
  %v1353 = vunpack.c.h.b16 %v1288
  %v1354 = vunpack.c.l.b16 %v1289
  %v1355 = vunpack.c.h.b16 %v1289
  %v1356 = vunpack.c.l.b16 %v1290
  %v1357 = vunpack.c.h.b16 %v1290
  %v1358 = vunpack.c.l.b16 %v1291
  %v1359 = vunpack.c.h.b16 %v1291
  %v1360 = vunpack.c.l.b16 %v1292
  %v1361 = vunpack.c.h.b16 %v1292
  %v1362 = vunpack.c.l.b16 %v1293
  %v1363 = vunpack.c.h.b16 %v1293
  %v1364 = vunpack.c.l.b16 %v1294
  %v1365 = vunpack.c.h.b16 %v1294
  %v1366 = vunpack.c.l.b16 %v1295
  %v1367 = vunpack.c.h.b16 %v1295
  %v1368 = vunpack.c.l.b16 %v1296
  %v1369 = vunpack.c.h.b16 %v1296
  %v1370 = vunpack.c.l.b16 %v1297
  %v1371 = vunpack.c.h.b16 %v1297
  %v1372 = vunpack.c.l.b16 %v1298
  %v1373 = vunpack.c.h.b16 %v1298
  %v1374 = vunpack.c.l.b16 %v1299
  %v1375 = vunpack.c.h.b16 %v1299
  %v1376 = vunpack.c.l.b16 %v1300
  %v1377 = vunpack.c.h.b16 %v1300
  %v1378 = vunpack.c.l.b16 %v1301
  %v1379 = vunpack.c.h.b16 %v1301
  %v1380 = vunpack.c.l.b16 %v1302
  %v1381 = vunpack.c.h.b16 %v1302
  %v1382 = vunpack.c.l.b16 %v1303
  %v1383 = vunpack.c.h.b16 %v1303
  %v1384 = vunpack.c.l.b16 %v1304
  %v1385 = vunpack.c.h.b16 %v1304
  %v1386 = vunpack.c.l.b16 %v1305
  %v1387 = vunpack.c.h.b16 %v1305
  %v1388 = vunpack.c.l.b16 %v1306
  %v1389 = vunpack.c.h.b16 %v1306
  %v1390 = vunpack.c.l.b16 %v1307
  %v1391 = vunpack.c.h.b16 %v1307
  %v1392 = vunpack.c.l.b16 %v1308
  %v1393 = vunpack.c.h.b16 %v1308
  %v1394 = vunpack.c.l.b16 %v1309
  %v1395 = vunpack.c.h.b16 %v1309
  %v1396 = vunpack.c.l.b16 %v1310
  %v1397 = vunpack.c.h.b16 %v1310
  %v1398 = vunpack.c.l.b16 %v1311
  %v1399 = vunpack.c.h.b16 %v1311
  %v1400 = vunpack.c.l.b16 %v1312
  %v1401 = vunpack.c.h.b16 %v1312
  %v1402 = vunpack.c.l.b16 %v1313
  %v1403 = vunpack.c.h.b16 %v1313
  %v1404 = vunpack.c.l.b16 %v1314
  %v1405 = vunpack.c.h.b16 %v1314
  %v1406 = vunpack.c.l.b16 %v1315
  %v1407 = vunpack.c.h.b16 %v1315
  %v1408 = vunpack.c.l.b16 %v1316
  %v1409 = vunpack.c.h.b16 %v1316
  %v1410 = vunpack.c.l.b16 %v1317
  %v1411 = vunpack.c.h.b16 %v1317
  %v1412 = vunpack.c.l.b16 %v1318
  %v1413 = vunpack.c.h.b16 %v1318
  %v1414 = vunpack.c.l.b16 %v1319
  %v1415 = vunpack.c.h.b16 %v1319
  %v1416 = vpack.c.b16 %v1352, %v1352
  %v1417 = vpack.c.b16 %v1353, %v1353
  %v1418 = vpack.c.b16 %v1354, %v1354
  %v1419 = vpack.c.b16 %v1355, %v1355
  %v1420 = vpack.c.b16 %v1356, %v1356
  %v1421 = vpack.c.b16 %v1357, %v1357
  %v1422 = vpack.c.b16 %v1358, %v1358
  %v1423 = vpack.c.b16 %v1359, %v1359
  %v1424 = vpack.c.b16 %v1360, %v1360
  %v1425 = vpack.c.b16 %v1361, %v1361
  %v1426 = vpack.c.b16 %v1362, %v1362
  %v1427 = vpack.c.b16 %v1363, %v1363
  %v1428 = vpack.c.b16 %v1364, %v1364
  %v1429 = vpack.c.b16 %v1365, %v1365
  %v1430 = vpack.c.b16 %v1366, %v1366
  %v1431 = vpack.c.b16 %v1367, %v1367
  %v1432 = vpack.c.b16 %v1368, %v1368
  %v1433 = vpack.c.b16 %v1369, %v1369
  %v1434 = vpack.c.b16 %v1370, %v1370
  %v1435 = vpack.c.b16 %v1371, %v1371
  %v1436 = vpack.c.b16 %v1372, %v1372
  %v1437 = vpack.c.b16 %v1373, %v1373
  %v1438 = vpack.c.b16 %v1374, %v1374
  %v1439 = vpack.c.b16 %v1375, %v1375
  %v1440 = vpack.c.b16 %v1376, %v1376
  %v1441 = vpack.c.b16 %v1377, %v1377
  %v1442 = vpack.c.b16 %v1378, %v1378
  %v1443 = vpack.c.b16 %v1379, %v1379
  %v1444 = vpack.c.b16 %v1380, %v1380
  %v1445 = vpack.c.b16 %v1381, %v1381
  %v1446 = vpack.c.b16 %v1382, %v1382
  %v1447 = vpack.c.b16 %v1383, %v1383
  %v1448 = vpack.c.b16 %v1384, %v1384
  %v1449 = vpack.c.b16 %v1385, %v1385
  %v1450 = vpack.c.b16 %v1386, %v1386
  %v1451 = vpack.c.b16 %v1387, %v1387
  %v1452 = vpack.c.b16 %v1388, %v1388
  %v1453 = vpack.c.b16 %v1389, %v1389
  %v1454 = vpack.c.b16 %v1390, %v1390
  %v1455 = vpack.c.b16 %v1391, %v1391
  %v1456 = vpack.c.b16 %v1392, %v1392
  %v1457 = vpack.c.b16 %v1393, %v1393
  %v1458 = vpack.c.b16 %v1394, %v1394
  %v1459 = vpack.c.b16 %v1395, %v1395
  %v1460 = vpack.c.b16 %v1396, %v1396
  %v1461 = vpack.c.b16 %v1397, %v1397
  %v1462 = vpack.c.b16 %v1398, %v1398
  %v1463 = vpack.c.b16 %v1399, %v1399
  %v1464 = vpack.c.b16 %v1400, %v1400
  %v1465 = vpack.c.b16 %v1401, %v1401
  %v1466 = vpack.c.b16 %v1402, %v1402
  %v1467 = vpack.c.b16 %v1403, %v1403
  %v1468 = vpack.c.b16 %v1404, %v1404
  %v1469 = vpack.c.b16 %v1405, %v1405
  %v1470 = vpack.c.b16 %v1406, %v1406
  %v1471 = vpack.c.b16 %v1407, %v1407
  %v1472 = vpack.c.b16 %v1408, %v1408
  %v1473 = vpack.c.b16 %v1409, %v1409
  %v1474 = vpack.c.b16 %v1410, %v1410
  %v1475 = vpack.c.b16 %v1411, %v1411
  %v1476 = vpack.c.b16 %v1412, %v1412
  %v1477 = vpack.c.b16 %v1413, %v1413
  %v1478 = vpack.c.b16 %v1414, %v1414
  %v1479 = vpack.c.b16 %v1415, %v1415
  %vm1544 = vcmask 125952
  %1545 = vst.msk [vmem:[%s3] sm:$0xf] %vm1544, %v1416
  %1546 = vst.msk [vmem:[%s3 + $0x4] sm:$0xf] %vm1544, %v1417
  %1547 = vst.msk [vmem:[%s3 + $0x8] sm:$0xf] %vm1544, %v1418
  %1548 = vst.msk [vmem:[%s3 + $0xc] sm:$0xf] %vm1544, %v1419
  %1549 = vst.msk [vmem:[%s3 + $0x10] sm:$0xf] %vm1544, %v1420
  %1550 = vst.msk [vmem:[%s3 + $0x14] sm:$0xf] %vm1544, %v1421
  %1551 = vst.msk [vmem:[%s3 + $0x18] sm:$0xf] %vm1544, %v1422
  %1552 = vst.msk [vmem:[%s3 + $0x1c] sm:$0xf] %vm1544, %v1423
  %1553 = vst.msk [vmem:[%s3 + $0x20] sm:$0xf] %vm1544, %v1424
  %1554 = vst.msk [vmem:[%s3 + $0x24] sm:$0xf] %vm1544, %v1425
  %1555 = vst.msk [vmem:[%s3 + $0x28] sm:$0xf] %vm1544, %v1426
  %1556 = vst.msk [vmem:[%s3 + $0x2c] sm:$0xf] %vm1544, %v1427
  %1557 = vst.msk [vmem:[%s3 + $0x30] sm:$0xf] %vm1544, %v1428
  %1558 = vst.msk [vmem:[%s3 + $0x34] sm:$0xf] %vm1544, %v1429
  %1559 = vst.msk [vmem:[%s3 + $0x38] sm:$0xf] %vm1544, %v1430
  %1560 = vst.msk [vmem:[%s3 + $0x3c] sm:$0xf] %vm1544, %v1431
  %1561 = vst.msk [vmem:[%s3 + $0x40] sm:$0xf] %vm1544, %v1432
  %1562 = vst.msk [vmem:[%s3 + $0x44] sm:$0xf] %vm1544, %v1433
  %1563 = vst.msk [vmem:[%s3 + $0x48] sm:$0xf] %vm1544, %v1434
  %1564 = vst.msk [vmem:[%s3 + $0x4c] sm:$0xf] %vm1544, %v1435
  %1565 = vst.msk [vmem:[%s3 + $0x50] sm:$0xf] %vm1544, %v1436
  %1566 = vst.msk [vmem:[%s3 + $0x54] sm:$0xf] %vm1544, %v1437
  %1567 = vst.msk [vmem:[%s3 + $0x58] sm:$0xf] %vm1544, %v1438
  %1568 = vst.msk [vmem:[%s3 + $0x5c] sm:$0xf] %vm1544, %v1439
  %1569 = vst.msk [vmem:[%s3 + $0x60] sm:$0xf] %vm1544, %v1440
  %1570 = vst.msk [vmem:[%s3 + $0x64] sm:$0xf] %vm1544, %v1441
  %1571 = vst.msk [vmem:[%s3 + $0x68] sm:$0xf] %vm1544, %v1442
  %1572 = vst.msk [vmem:[%s3 + $0x6c] sm:$0xf] %vm1544, %v1443
  %1573 = vst.msk [vmem:[%s3 + $0x70] sm:$0xf] %vm1544, %v1444
  %1574 = vst.msk [vmem:[%s3 + $0x74] sm:$0xf] %vm1544, %v1445
  %1575 = vst.msk [vmem:[%s3 + $0x78] sm:$0xf] %vm1544, %v1446
  %1576 = vst.msk [vmem:[%s3 + $0x7c] sm:$0xf] %vm1544, %v1447
  %1577 = vst.msk [vmem:[%s3 + $0x80] sm:$0xf] %vm1544, %v1448
  %1578 = vst.msk [vmem:[%s3 + $0x84] sm:$0xf] %vm1544, %v1449
  %1579 = vst.msk [vmem:[%s3 + $0x88] sm:$0xf] %vm1544, %v1450
  %1580 = vst.msk [vmem:[%s3 + $0x8c] sm:$0xf] %vm1544, %v1451
  %1581 = vst.msk [vmem:[%s3 + $0x90] sm:$0xf] %vm1544, %v1452
  %1582 = vst.msk [vmem:[%s3 + $0x94] sm:$0xf] %vm1544, %v1453
  %1583 = vst.msk [vmem:[%s3 + $0x98] sm:$0xf] %vm1544, %v1454
  %1584 = vst.msk [vmem:[%s3 + $0x9c] sm:$0xf] %vm1544, %v1455
  %1585 = vst.msk [vmem:[%s3 + $0xa0] sm:$0xf] %vm1544, %v1456
  %1586 = vst.msk [vmem:[%s3 + $0xa4] sm:$0xf] %vm1544, %v1457
  %1587 = vst.msk [vmem:[%s3 + $0xa8] sm:$0xf] %vm1544, %v1458
  %1588 = vst.msk [vmem:[%s3 + $0xac] sm:$0xf] %vm1544, %v1459
  %1589 = vst.msk [vmem:[%s3 + $0xb0] sm:$0xf] %vm1544, %v1460
  %1590 = vst.msk [vmem:[%s3 + $0xb4] sm:$0xf] %vm1544, %v1461
  %1591 = vst.msk [vmem:[%s3 + $0xb8] sm:$0xf] %vm1544, %v1462
  %1592 = vst.msk [vmem:[%s3 + $0xbc] sm:$0xf] %vm1544, %v1463
  %1593 = vst.msk [vmem:[%s3 + $0xc0] sm:$0xf] %vm1544, %v1464
  %1594 = vst.msk [vmem:[%s3 + $0xc4] sm:$0xf] %vm1544, %v1465
  %1595 = vst.msk [vmem:[%s3 + $0xc8] sm:$0xf] %vm1544, %v1466
  %1596 = vst.msk [vmem:[%s3 + $0xcc] sm:$0xf] %vm1544, %v1467
  %1597 = vst.msk [vmem:[%s3 + $0xd0] sm:$0xf] %vm1544, %v1468
  %1598 = vst.msk [vmem:[%s3 + $0xd4] sm:$0xf] %vm1544, %v1469
  %1599 = vst.msk [vmem:[%s3 + $0xd8] sm:$0xf] %vm1544, %v1470
  %1600 = vst.msk [vmem:[%s3 + $0xdc] sm:$0xf] %vm1544, %v1471
  %1601 = vst.msk [vmem:[%s3 + $0xe0] sm:$0xf] %vm1544, %v1472
  %1602 = vst.msk [vmem:[%s3 + $0xe4] sm:$0xf] %vm1544, %v1473
  %1603 = vst.msk [vmem:[%s3 + $0xe8] sm:$0xf] %vm1544, %v1474
  %1604 = vst.msk [vmem:[%s3 + $0xec] sm:$0xf] %vm1544, %v1475
  %1605 = vst.msk [vmem:[%s3 + $0xf0] sm:$0xf] %vm1544, %v1476
  %1606 = vst.msk [vmem:[%s3 + $0xf4] sm:$0xf] %vm1544, %v1477
  %1607 = vst.msk [vmem:[%s3 + $0xf8] sm:$0xf] %vm1544, %v1478
  %1608 = vst.msk [vmem:[%s3 + $0xfc] sm:$0xf] %vm1544, %v1479
  // Predicated region
  $region14: #{tpu_custom_call.1} parent=0 // pred_check
    _
  $region15: #{tpu_custom_call.1} parent=0 // pred_check_branch
    %1610 = sbr.rel (0) target = $region17
  $region16: #{tpu_custom_call.1} parent=0 // pred_region
    _
  $region17: #{tpu_custom_call.1} parent=0 // pred_fallthru
    _
  // Predicated region
  $region18: #{tpu_custom_call.1} parent=0 // pred_check
    _
  $region19: #{tpu_custom_call.1} parent=0 // pred_check_branch
    %1612 = sbr.rel (0) target = $region21
  $region20: #{tpu_custom_call.1} parent=0 // pred_region
    _
  $region21: #{tpu_custom_call.1} parent=0 // pred_fallthru
    _
  // Predicated region
  $region22: #{tpu_custom_call.1} parent=0 // pred_check
    _
  $region23: #{tpu_custom_call.1} parent=0 // pred_check_branch
    %1614 = sbr.rel (0) target = $region25
  $region24: #{tpu_custom_call.1} parent=0 // pred_region
    _
  $region25: #{tpu_custom_call.1} parent=0 // pred_fallthru
    _
  // Predicated region
  $region26: #{tpu_custom_call.1} parent=0 // pred_check
    _
  $region27: #{tpu_custom_call.1} parent=0 // pred_check_branch
    %1616 = sbr.rel (0) target = $region29
  $region28: #{tpu_custom_call.1} parent=0 // pred_region
    _
  $region29: #{tpu_custom_call.1} parent=0 // pred_fallthru
    _

</llo_original>
